<compile_context>
chip_gen: v6e
topology: v6e:2x2x1
jax: 0.10.0
libtpu: 0.0.40
codegen_flags: <defaults>
</compile_context>

<pallas_src>
import functools

import jax
import jax.numpy as jnp
from jax.experimental import pallas as pl
from jax.experimental.pallas import tpu as pltpu

_MM_DTYPE = jnp.bfloat16  # MXU operand dtype; accumulation stays float32.


# ---------------------------------------------------------------------------
# Single fused forward kernel
# ---------------------------------------------------------------------------
def _fused_forward_kernel(agg_ref, feat_ref, embds_ref, colmask_ref, keep_ref,
                          w0_ref, b0_ref, wn1_ref, ws1_ref, b1_ref,
                          wp_ref, bp_ref, loss_ref, *, temp, drop_p):
    n = feat_ref.shape[0]
    agg = agg_ref[...]                                    # (n, n) bf16

    # ---- attrMask: keep feature column j iff uniform_j < prob_attr ----
    h = feat_ref[...] * colmask_ref[...]                  # (n, in_dim) f32

    # ---- SAGE layer 0: aggregate-first, packed [W_neigh0; W_self0], ReLU ----
    neigh0 = jnp.dot(agg, h.astype(_MM_DTYPE),
                     preferred_element_type=jnp.float32)  # (n, in_dim)
    x0 = jnp.concatenate([neigh0, h], axis=1).astype(_MM_DTYPE)   # (n, 2*in)
    h = jnp.dot(x0, w0_ref[...], preferred_element_type=jnp.float32)
    h = jnp.maximum(h + b0_ref[...], 0.0)                 # (n, hidden)

    # ---- dropout p=0.5 (inverted scaling, train=True) ----
    h = h * keep_ref[...] * (1.0 / (1.0 - drop_p))

    # ---- SAGE layer 1: project-before-aggregate (out_dim < hidden), ReLU ----
    hb = h.astype(_MM_DTYPE)
    neigh_pre = jnp.dot(hb, wn1_ref[...],
                        preferred_element_type=jnp.float32)        # (n, out)
    neigh1 = jnp.dot(agg, neigh_pre.astype(_MM_DTYPE),
                     preferred_element_type=jnp.float32)           # (n, out)
    self1 = jnp.dot(hb, ws1_ref[...], preferred_element_type=jnp.float32)
    h1 = jnp.maximum(neigh1 + self1 + b1_ref[...], 0.0)   # (n, out_dim)

    # ---- stacked projection  z = ELU([h1; embds] @ Wp + bp) ----
    stacked = jnp.concatenate([h1, embds_ref[...]], axis=0).astype(_MM_DTYPE)
    y = jnp.dot(stacked, wp_ref[...],
                preferred_element_type=jnp.float32) + bp_ref[...]  # (2n, P)
    z = jnp.where(y > 0.0, y, jnp.exp(jnp.minimum(y, 0.0)) - 1.0)  # ELU(a=1)

    # ---- F.normalize (eps=1e-12 on the norm == 1e-24 on the squared norm) ----
    inv = jax.lax.rsqrt(jnp.maximum(jnp.sum(z * z, -1, keepdims=True), 1e-24))
    zn = z * inv
    zb = zn.astype(_MM_DTYPE)                             # (2n, P) bf16

    # ---- symmetric contrastive loss: ONE stacked Gram matrix (2n, 2n) ----
    # TODO(synk): flash-style tile this block (stream key blocks, keep running
    # row sums) and add a parallel row-block grid before scaling N past a few
    # hundred nodes (v7x has 2 TCs x 64 MiB VMEM each).
    inv_t = 1.0 / temp
    g = jax.lax.dot_general(zb, zb, (((1,), (1,)), ((), ())),
                            preferred_element_type=jnp.float32)    # (2n, 2n)
    e = jnp.exp(g * inv_t)                  # similarities in [-1,1]: no overflow
    rs = jnp.sum(e, axis=-1, keepdims=True)               # (2n, 1)
    # rs[:n]  = row11 + row12        rs[n:] = row21(=col12) + row22

    # Diagonals straight from the bf16-cast vectors (f32 products, consistent
    # with the MXU's bf16 x bf16 -> f32 accumulation) -- no N x N eye mask.
    zf = zb.astype(jnp.float32)
    d_self = jnp.exp(jnp.sum(zf * zf, -1, keepdims=True) * inv_t)  # (2n, 1)
    s12 = jnp.sum(zf[:n] * zf[n:], -1, keepdims=True) * inv_t      # (n, 1)

    # loss_i = -log(exp(diag12)/x_i) = log(x_i) - diag12  (skips exp/log pair)
    x = rs - d_self                                        # (2n, 1) denominators
    # mean over nodes of (l1 + l2)/2  ==  (sum log x - 2*sum diag12) / (2n)
    loss_ref[...] = (jnp.sum(jnp.log(x), axis=0, keepdims=True)
                     - 2.0 * jnp.sum(s12, axis=0, keepdims=True)) * (1.0 / (2 * n))


# ---------------------------------------------------------------------------
# Parameters (layer-0 SAGE weights pre-packed: [W_neigh0; W_self0] on K)
# ---------------------------------------------------------------------------
def init_params(key, in_dim, hidden, out_dim, proj_dim):
    ks = jax.random.split(key, 5)
    scale = 0.1
    wn0 = scale * jax.random.normal(ks[0], (in_dim, hidden), jnp.float32)
    ws0 = scale * jax.random.normal(ks[1], (in_dim, hidden), jnp.float32)
    wn1 = scale * jax.random.normal(ks[2], (hidden, out_dim), jnp.float32)
    ws1 = scale * jax.random.normal(ks[3], (hidden, out_dim), jnp.float32)
    wp = scale * jax.random.normal(ks[4], (out_dim, proj_dim), jnp.float32)
    return dict(
        w0=jnp.concatenate([wn0, ws0], axis=0).astype(_MM_DTYPE),
        b0=jnp.zeros((1, hidden), jnp.float32),
        wn1=wn1.astype(_MM_DTYPE),
        ws1=ws1.astype(_MM_DTYPE),
        b1=jnp.zeros((1, out_dim), jnp.float32),
        wp=wp.astype(_MM_DTYPE),
        bp=jnp.zeros((1, proj_dim), jnp.float32),
    )


# ---------------------------------------------------------------------------
# Model.forward wrapper: one pallas_call
# ---------------------------------------------------------------------------
@functools.partial(jax.jit, static_argnames=("temp", "prob_attr", "drop_p"))
def model_forward(params, agg_bf16, feat1, embds, rng_key, *, temp, prob_attr,
                  drop_p=0.5):
    n, in_dim = feat1.shape
    hidden = params['b0'].shape[-1]

    # Random masks generated outside the kernel (stateful TPU PRNG has no
    # interpret-mode lowering); tiny f32 inputs, negligible HBM traffic.
    k_attr, k_drop = jax.random.split(rng_key)
    col_mask = (jax.random.uniform(k_attr, (1, in_dim))
                < prob_attr).astype(jnp.float32)               # keep prob = prob_attr
    keep = jax.random.bernoulli(k_drop, 1.0 - drop_p,
                                (n, hidden)).astype(jnp.float32)

    kernel = functools.partial(_fused_forward_kernel, temp=temp, drop_p=drop_p)
    vmem = pl.BlockSpec(memory_space=pltpu.MemorySpace.VMEM)

    # Scoped-VMEM budget sized from N (agg bf16 + (2N)^2 f32 Gram/exp +
    # activations/weights + headroom), clamped well below physical VMEM.
    vmem_bytes = int(min(100 << 20, 48 * n * n + (16 << 20)))
    compiler_params = None
    if jax.default_backend() == "tpu":
        compiler_params = pltpu.CompilerParams(vmem_limit_bytes=vmem_bytes)

    out = pl.pallas_call(
        kernel,
        out_shape=jax.ShapeDtypeStruct((1, 1), jnp.float32),
        in_specs=[vmem] * 12,
        out_specs=vmem,
        compiler_params=compiler_params,
    )(agg_bf16, feat1, embds, col_mask, keep,
      params['w0'], params['b0'], params['wn1'], params['ws1'], params['b1'],
      params['wp'], params['bp'])
    return out[0, 0]


if __name__ == "__main__":
    N = 128        # nodes per block (src == dst), fills MXU rows
    IN_DIM = 32
    HIDDEN = 128   # fixed by Model.__init__ ('sage' -> n_hidden=128)
    OUT_DIM = 64
    PROJ_DIM = 128  # fixed by Model.__init__ (proj MLP out_dim=128)
    TEMP = 0.5
    PROB_ATTR = 0.5

    root = jax.random.PRNGKey(0)
    k_param, k_feat, k_emb, k_adj, k_edge, k_rng = jax.random.split(root, 6)

    params = init_params(k_param, IN_DIM, HIDDEN, OUT_DIM, PROJ_DIM)
    feat1 = jax.random.normal(k_feat, (N, IN_DIM), jnp.float32)
    embds = jax.random.normal(k_emb, (N, OUT_DIM), jnp.float32)

    # Dense graph block: random edges + dense adjacency edge weights,
    # mean-normalized by in-degree -> (N_dst, N_src) aggregation matrix.
    # TODO(synk): DGL block / scipy-sparse adj host-side indexing
    # (srcdata['_ID'], block.edges()) has no Pallas equivalent; the graph is
    # pre-densified into `agg` instead.
    edges = (jax.random.uniform(k_edge, (N, N)) < 0.3).astype(jnp.float32)
    adj_w = jax.random.uniform(k_adj, (N, N), jnp.float32)
    deg = jnp.maximum(jnp.sum(edges, axis=1, keepdims=True), 1.0)
    agg = (edges * adj_w) / deg
    agg_bf16 = agg.astype(_MM_DTYPE)   # cast ONCE (static graph), not per step

    loss = model_forward(params, agg_bf16, feat1, embds, k_rng,
                         temp=TEMP, prob_attr=PROB_ATTR)
    loss = jax.block_until_ready(loss)
    assert jnp.isfinite(loss), "loss is not finite"
    print("KERNEL_OK")
</pallas_src>

<mosaic_0001>
module attributes {stable_mosaic.version = 11 : i64} {
  func.func @_fused_forward_kernel(%arg0: memref<128x128xbf16, #tpu.memory_space<vmem>>, %arg1: memref<128x32xf32, #tpu.memory_space<vmem>>, %arg2: memref<128x64xf32, #tpu.memory_space<vmem>>, %arg3: memref<1x32xf32, #tpu.memory_space<vmem>>, %arg4: memref<128x128xf32, #tpu.memory_space<vmem>>, %arg5: memref<64x128xbf16, #tpu.memory_space<vmem>>, %arg6: memref<1x128xf32, #tpu.memory_space<vmem>>, %arg7: memref<128x64xbf16, #tpu.memory_space<vmem>>, %arg8: memref<128x64xbf16, #tpu.memory_space<vmem>>, %arg9: memref<1x64xf32, #tpu.memory_space<vmem>>, %arg10: memref<64x128xbf16, #tpu.memory_space<vmem>>, %arg11: memref<1x128xf32, #tpu.memory_space<vmem>>, %arg12: memref<1x1xf32, #tpu.memory_space<vmem>>) attributes {dimension_semantics = [], scalar_prefetch = 0 : i64, scratch_operands = 0 : i64, tpu.core_type = #tpu.core_type<tc>} {
    %c0 = arith.constant 0 : index
    %c0_0 = arith.constant 0 : index
    %0 = vector.load %arg0[%c0, %c0_0] : memref<128x128xbf16, #tpu.memory_space<vmem>>, vector<128x128xbf16>
    %c0_1 = arith.constant 0 : index
    %c0_2 = arith.constant 0 : index
    %1 = vector.load %arg1[%c0_1, %c0_2] : memref<128x32xf32, #tpu.memory_space<vmem>>, vector<128x32xf32>
    %c0_3 = arith.constant 0 : index
    %c0_4 = arith.constant 0 : index
    %2 = vector.load %arg3[%c0_3, %c0_4] : memref<1x32xf32, #tpu.memory_space<vmem>>, vector<1x32xf32>
    %3 = vector.broadcast %2 : vector<1x32xf32> to vector<128x32xf32>
    %4 = arith.mulf %1, %3 : vector<128x32xf32>
    %5 = arith.truncf %4 : vector<128x32xf32> to vector<128x32xbf16>
    %cst = arith.constant dense<0.000000e+00> : vector<128x32xf32>
    %6 = tpu.matmul %0, %5, %cst {dimension_numbers = #tpu.dot_dimension_numbers<[1], [0], [0], [1], [0, 0, 1, 1], [], []>} : vector<128x128xbf16>, vector<128x32xbf16>, vector<128x32xf32> -> vector<128x32xf32>
    %7 = tpu.concatenate %6, %4 in 1 : vector<128x32xf32>, vector<128x32xf32> -> vector<128x64xf32>
    %8 = arith.truncf %7 : vector<128x64xf32> to vector<128x64xbf16>
    %c0_5 = arith.constant 0 : index
    %c0_6 = arith.constant 0 : index
    %9 = vector.load %arg5[%c0_5, %c0_6] : memref<64x128xbf16, #tpu.memory_space<vmem>>, vector<64x128xbf16>
    %cst_7 = arith.constant dense<0.000000e+00> : vector<128x128xf32>
    %10 = tpu.matmul %8, %9, %cst_7 {dimension_numbers = #tpu.dot_dimension_numbers<[1], [0], [0], [1], [0, 0, 1, 1], [], []>} : vector<128x64xbf16>, vector<64x128xbf16>, vector<128x128xf32> -> vector<128x128xf32>
    %c0_8 = arith.constant 0 : index
    %c0_9 = arith.constant 0 : index
    %11 = vector.load %arg6[%c0_8, %c0_9] : memref<1x128xf32, #tpu.memory_space<vmem>>, vector<1x128xf32>
    %12 = vector.broadcast %11 : vector<1x128xf32> to vector<128x128xf32>
    %13 = arith.addf %10, %12 : vector<128x128xf32>
    %cst_10 = arith.constant 0.000000e+00 : f32
    %14 = vector.broadcast %cst_10 : f32 to vector<128x128xf32>
    %15 = arith.maximumf %13, %14 : vector<128x128xf32>
    %c0_11 = arith.constant 0 : index
    %c0_12 = arith.constant 0 : index
    %16 = vector.load %arg4[%c0_11, %c0_12] : memref<128x128xf32, #tpu.memory_space<vmem>>, vector<128x128xf32>
    %17 = arith.mulf %15, %16 : vector<128x128xf32>
    %cst_13 = arith.constant 2.000000e+00 : f32
    %18 = vector.broadcast %cst_13 : f32 to vector<128x128xf32>
    %19 = arith.mulf %17, %18 : vector<128x128xf32>
    %20 = arith.truncf %19 : vector<128x128xf32> to vector<128x128xbf16>
    %c0_14 = arith.constant 0 : index
    %c0_15 = arith.constant 0 : index
    %21 = vector.load %arg7[%c0_14, %c0_15] : memref<128x64xbf16, #tpu.memory_space<vmem>>, vector<128x64xbf16>
    %cst_16 = arith.constant dense<0.000000e+00> : vector<128x64xf32>
    %22 = tpu.matmul %20, %21, %cst_16 {dimension_numbers = #tpu.dot_dimension_numbers<[1], [0], [0], [1], [0, 0, 1, 1], [], []>} : vector<128x128xbf16>, vector<128x64xbf16>, vector<128x64xf32> -> vector<128x64xf32>
    %23 = arith.truncf %22 : vector<128x64xf32> to vector<128x64xbf16>
    %cst_17 = arith.constant dense<0.000000e+00> : vector<128x64xf32>
    %24 = tpu.matmul %0, %23, %cst_17 {dimension_numbers = #tpu.dot_dimension_numbers<[1], [0], [0], [1], [0, 0, 1, 1], [], []>} : vector<128x128xbf16>, vector<128x64xbf16>, vector<128x64xf32> -> vector<128x64xf32>
    %c0_18 = arith.constant 0 : index
    %c0_19 = arith.constant 0 : index
    %25 = vector.load %arg8[%c0_18, %c0_19] : memref<128x64xbf16, #tpu.memory_space<vmem>>, vector<128x64xbf16>
    %cst_20 = arith.constant dense<0.000000e+00> : vector<128x64xf32>
    %26 = tpu.matmul %20, %25, %cst_20 {dimension_numbers = #tpu.dot_dimension_numbers<[1], [0], [0], [1], [0, 0, 1, 1], [], []>} : vector<128x128xbf16>, vector<128x64xbf16>, vector<128x64xf32> -> vector<128x64xf32>
    %27 = arith.addf %24, %26 : vector<128x64xf32>
    %c0_21 = arith.constant 0 : index
    %c0_22 = arith.constant 0 : index
    %28 = vector.load %arg9[%c0_21, %c0_22] : memref<1x64xf32, #tpu.memory_space<vmem>>, vector<1x64xf32>
    %29 = vector.broadcast %28 : vector<1x64xf32> to vector<128x64xf32>
    %30 = arith.addf %27, %29 : vector<128x64xf32>
    %cst_23 = arith.constant 0.000000e+00 : f32
    %31 = vector.broadcast %cst_23 : f32 to vector<128x64xf32>
    %32 = arith.maximumf %30, %31 : vector<128x64xf32>
    %c0_24 = arith.constant 0 : index
    %c0_25 = arith.constant 0 : index
    %33 = vector.load %arg2[%c0_24, %c0_25] : memref<128x64xf32, #tpu.memory_space<vmem>>, vector<128x64xf32>
    %34 = tpu.concatenate %32, %33 in 0 : vector<128x64xf32>, vector<128x64xf32> -> vector<256x64xf32>
    %35 = arith.truncf %34 : vector<256x64xf32> to vector<256x64xbf16>
    %c0_26 = arith.constant 0 : index
    %c0_27 = arith.constant 0 : index
    %36 = vector.load %arg10[%c0_26, %c0_27] : memref<64x128xbf16, #tpu.memory_space<vmem>>, vector<64x128xbf16>
    %cst_28 = arith.constant dense<0.000000e+00> : vector<256x128xf32>
    %37 = tpu.matmul %35, %36, %cst_28 {dimension_numbers = #tpu.dot_dimension_numbers<[1], [0], [0], [1], [0, 0, 1, 1], [], []>} : vector<256x64xbf16>, vector<64x128xbf16>, vector<256x128xf32> -> vector<256x128xf32>
    %c0_29 = arith.constant 0 : index
    %c0_30 = arith.constant 0 : index
    %38 = vector.load %arg11[%c0_29, %c0_30] : memref<1x128xf32, #tpu.memory_space<vmem>>, vector<1x128xf32>
    %39 = vector.broadcast %38 : vector<1x128xf32> to vector<256x128xf32>
    %40 = arith.addf %37, %39 : vector<256x128xf32>
    %cst_31 = arith.constant 0.000000e+00 : f32
    %41 = vector.broadcast %cst_31 : f32 to vector<256x128xf32>
    %42 = arith.cmpf ogt, %40, %41 : vector<256x128xf32>
    %cst_32 = arith.constant 0.000000e+00 : f32
    %43 = vector.broadcast %cst_32 : f32 to vector<256x128xf32>
    %44 = arith.minimumf %40, %43 : vector<256x128xf32>
    %45 = math.exp %44 : vector<256x128xf32>
    %cst_33 = arith.constant 1.000000e+00 : f32
    %46 = vector.broadcast %cst_33 : f32 to vector<256x128xf32>
    %47 = arith.subf %45, %46 : vector<256x128xf32>
    %48 = arith.select %42, %40, %47 : vector<256x128xi1>, vector<256x128xf32>
    %49 = arith.mulf %48, %48 : vector<256x128xf32>
    %cst_34 = arith.constant dense<0.000000e+00> : vector<256xf32>
    %50 = vector.multi_reduction <add>, %49, %cst_34 [1] : vector<256x128xf32> to vector<256xf32>
    %51 = vector.shape_cast %50 : vector<256xf32> to vector<256x1xf32>
    %cst_35 = arith.constant 1.000000e-24 : f32
    %52 = vector.broadcast %cst_35 : f32 to vector<256x1xf32>
    %53 = arith.maximumf %51, %52 : vector<256x1xf32>
    %54 = math.rsqrt %53 : vector<256x1xf32>
    %55 = vector.broadcast %54 : vector<256x1xf32> to vector<256x128xf32>
    %56 = arith.mulf %48, %55 : vector<256x128xf32>
    %57 = arith.truncf %56 : vector<256x128xf32> to vector<256x128xbf16>
    %cst_36 = arith.constant dense<0.000000e+00> : vector<256x256xf32>
    %58 = tpu.matmul %57, %57, %cst_36 {dimension_numbers = #tpu.dot_dimension_numbers<[1], [1], [0], [0], [0, 0, 1, 0], [], []>} : vector<256x128xbf16>, vector<256x128xbf16>, vector<256x256xf32> -> vector<256x256xf32>
    %cst_37 = arith.constant 2.000000e+00 : f32
    %59 = vector.broadcast %cst_37 : f32 to vector<256x256xf32>
    %60 = arith.mulf %58, %59 : vector<256x256xf32>
    %61 = math.exp %60 : vector<256x256xf32>
    %cst_38 = arith.constant dense<0.000000e+00> : vector<256xf32>
    %62 = vector.multi_reduction <add>, %61, %cst_38 [1] : vector<256x256xf32> to vector<256xf32>
    %63 = vector.shape_cast %62 : vector<256xf32> to vector<256x1xf32>
    %64 = arith.extf %57 : vector<256x128xbf16> to vector<256x128xf32>
    %65 = arith.mulf %64, %64 : vector<256x128xf32>
    %cst_39 = arith.constant dense<0.000000e+00> : vector<256xf32>
    %66 = vector.multi_reduction <add>, %65, %cst_39 [1] : vector<256x128xf32> to vector<256xf32>
    %67 = vector.shape_cast %66 : vector<256xf32> to vector<256x1xf32>
    %cst_40 = arith.constant 2.000000e+00 : f32
    %68 = vector.broadcast %cst_40 : f32 to vector<256x1xf32>
    %69 = arith.mulf %67, %68 : vector<256x1xf32>
    %70 = math.exp %69 : vector<256x1xf32>
    %71 = vector.extract_strided_slice %64 {offsets = [0, 0], sizes = [128, 128], strides = [1, 1]} : vector<256x128xf32> to vector<128x128xf32>
    %72 = vector.extract_strided_slice %64 {offsets = [128, 0], sizes = [128, 128], strides = [1, 1]} : vector<256x128xf32> to vector<128x128xf32>
    %73 = arith.mulf %71, %72 : vector<128x128xf32>
    %cst_41 = arith.constant dense<0.000000e+00> : vector<128xf32>
    %74 = vector.multi_reduction <add>, %73, %cst_41 [1] : vector<128x128xf32> to vector<128xf32>
    %75 = vector.shape_cast %74 : vector<128xf32> to vector<128x1xf32>
    %cst_42 = arith.constant 2.000000e+00 : f32
    %76 = vector.broadcast %cst_42 : f32 to vector<128x1xf32>
    %77 = arith.mulf %75, %76 : vector<128x1xf32>
    %78 = arith.subf %63, %70 : vector<256x1xf32>
    %79 = math.log %78 : vector<256x1xf32>
    %cst_43 = arith.constant dense<0.000000e+00> : vector<1xf32>
    %80 = vector.multi_reduction <add>, %79, %cst_43 [0] : vector<256x1xf32> to vector<1xf32>
    %81 = vector.shape_cast %80 : vector<1xf32> to vector<1x1xf32>
    %cst_44 = arith.constant dense<0.000000e+00> : vector<1xf32>
    %82 = vector.multi_reduction <add>, %77, %cst_44 [0] : vector<128x1xf32> to vector<1xf32>
    %83 = vector.shape_cast %82 : vector<1xf32> to vector<1x1xf32>
    %cst_45 = arith.constant 2.000000e+00 : f32
    %84 = vector.broadcast %cst_45 : f32 to vector<1x1xf32>
    %85 = arith.mulf %84, %83 : vector<1x1xf32>
    %86 = arith.subf %81, %85 : vector<1x1xf32>
    %cst_46 = arith.constant 3.906250e-03 : f32
    %87 = vector.broadcast %cst_46 : f32 to vector<1x1xf32>
    %88 = arith.mulf %86, %87 : vector<1x1xf32>
    %c0_47 = arith.constant 0 : index
    %c0_48 = arith.constant 0 : index
    %89 = vector.load %arg12[%c0_47, %c0_48] : memref<1x1xf32, #tpu.memory_space<vmem>>, vector<1x1xf32>
    tpu.vector_store %arg12[%c0_47, %c0_48], %88 {strides = array<i32>} : memref<1x1xf32, #tpu.memory_space<vmem>>, vector<1x1xf32>,
    return
  }
}

</mosaic_0001>

<llo_original>
// kernel: model_forward.3
$region0: #{model_forward.3}
  #allocation0 [shape = 'u32[]', space=smem, size = 0x4, offset = 0x4, fixed_abs, tag = 'smem constant byte address 0x4 - core index']
  #allocation1 [shape = 'u32[144,128]{1,0:T(1,128)}', space=vmem, size = 0x12000, scoped, tag = 'internal scratch']
  %s0 = inlined_call_operand.vmem [shape: bf16[128,128], index: 0, kind: input, shape index: {}]
  %s1 = inlined_call_operand.vmem [shape: f32[128,32], index: 1, kind: input, shape index: {}]
  %s2 = inlined_call_operand.vmem [shape: f32[128,64], index: 2, kind: input, shape index: {}]
  %s3 = inlined_call_operand.vmem [shape: f32[1,32], index: 3, kind: input, shape index: {}]
  %s4 = inlined_call_operand.vmem [shape: f32[128,128], index: 4, kind: input, shape index: {}]
  %s5 = inlined_call_operand.vmem [shape: bf16[64,128], index: 5, kind: input, shape index: {}]
  %s6 = inlined_call_operand.vmem [shape: f32[1,128], index: 6, kind: input, shape index: {}]
  %s7 = inlined_call_operand.vmem [shape: bf16[128,64], index: 7, kind: input, shape index: {}]
  %s8 = inlined_call_operand.vmem [shape: bf16[128,64], index: 8, kind: input, shape index: {}]
  %s9 = inlined_call_operand.vmem [shape: f32[1,64], index: 9, kind: input, shape index: {}]
  %s10 = inlined_call_operand.vmem [shape: bf16[64,128], index: 10, kind: input, shape index: {}]
  %s11 = inlined_call_operand.vmem [shape: f32[1,128], index: 11, kind: input, shape index: {}]
  %s12 = inlined_call_operand.hbm [shape: f32[1,1], index: 12, kind: output, shape index: {}]
  %s13 = sld [smem:[#allocation0]]
  $region58: #{model_forward.3} parent=0
    _
  %s15 = ssub.s32 1, %s13
  %s16 = scalar_select 0, %s15, %s13
  $region1: #{model_forward.3} parent=0
    #allocation2 [shape = 'u8[512]{0}', space=vmem, size = 0x400, scoped, tag = 'output window, operand 0, single buffered']
    #allocation3 [shape = 's32[1]{0}', space=sflag, size = 0x4, scoped, tag = 'scoped memory for model_forward.3']
    %17 = vsyncpa [#allocation3], 0
    // Predicated region
    $region2: #{model_forward.3} parent=1 // pred_check
      _
    $region3: #{model_forward.3} parent=1 // pred_check_branch
      %19 = sbr.rel (0) target = $region5
    $region4: #{model_forward.3} parent=1 // pred_region
      _
    $region5: #{model_forward.3} parent=1 // pred_fallthru
      _
    // Predicated region
    $region6: #{model_forward.3} parent=1 // pred_check
      _
    $region7: #{model_forward.3} parent=1 // pred_check_branch
      %21 = sbr.rel (0) target = $region9
    $region8: #{model_forward.3} parent=1 // pred_region
      _
    $region9: #{model_forward.3} parent=1 // pred_fallthru
      _
    // Predicated region
    $region10: #{model_forward.3} parent=1 // pred_check
      _
    $region11: #{model_forward.3} parent=1 // pred_check_branch
      %23 = sbr.rel (0) target = $region13
    $region12: #{model_forward.3} parent=1 // pred_region
      _
    $region13: #{model_forward.3} parent=1 // pred_fallthru
      _
    // Predicated region
    $region14: #{model_forward.3} parent=1 // pred_check
      _
    $region15: #{model_forward.3} parent=1 // pred_check_branch
      %25 = sbr.rel (0) target = $region17
    $region16: #{model_forward.3} parent=1 // pred_region
      _
    $region17: #{model_forward.3} parent=1 // pred_fallthru
      _
    // Predicated region
    $region18: #{model_forward.3} parent=1 // pred_check
      _
    $region19: #{model_forward.3} parent=1 // pred_check_branch
      %27 = sbr.rel (0) target = $region21
    $region20: #{model_forward.3} parent=1 // pred_region
      _
    $region21: #{model_forward.3} parent=1 // pred_fallthru
      _
    // Predicated region
    $region22: #{model_forward.3} parent=1 // pred_check
      _
    $region23: #{model_forward.3} parent=1 // pred_check_branch
      %29 = sbr.rel (0) target = $region25
    $region24: #{model_forward.3} parent=1 // pred_region
      _
    $region25: #{model_forward.3} parent=1 // pred_fallthru
      _
    // Predicated region
    $region26: #{model_forward.3} parent=1 // pred_check
      _
    $region27: #{model_forward.3} parent=1 // pred_check_branch
      %31 = sbr.rel (0) target = $region29
    $region28: #{model_forward.3} parent=1 // pred_region
      _
    $region29: #{model_forward.3} parent=1 // pred_fallthru
      _
    // Predicated region
    $region30: #{model_forward.3} parent=1 // pred_check
      _
    $region31: #{model_forward.3} parent=1 // pred_check_branch
      %33 = sbr.rel (0) target = $region33
    $region32: #{model_forward.3} parent=1 // pred_region
      _
    $region33: #{model_forward.3} parent=1 // pred_fallthru
      _
    // Predicated region
    $region34: #{model_forward.3} parent=1 // pred_check
      _
    $region35: #{model_forward.3} parent=1 // pred_check_branch
      %35 = sbr.rel (0) target = $region37
    $region36: #{model_forward.3} parent=1 // pred_region
      _
    $region37: #{model_forward.3} parent=1 // pred_fallthru
      _
    // Predicated region
    $region38: #{model_forward.3} parent=1 // pred_check
      _
    $region39: #{model_forward.3} parent=1 // pred_check_branch
      %37 = sbr.rel (0) target = $region41
    $region40: #{model_forward.3} parent=1 // pred_region
      _
    $region41: #{model_forward.3} parent=1 // pred_fallthru
      _
    // Predicated region
    $region42: #{model_forward.3} parent=1 // pred_check
      _
    $region43: #{model_forward.3} parent=1 // pred_check_branch
      %39 = sbr.rel (0) target = $region45
    $region44: #{model_forward.3} parent=1 // pred_region
      _
    $region45: #{model_forward.3} parent=1 // pred_fallthru
      _
    // Predicated region
    $region46: #{model_forward.3} parent=1 // pred_check
      _
    $region47: #{model_forward.3} parent=1 // pred_check_branch
      %41 = sbr.rel (0) target = $region49
    $region48: #{model_forward.3} parent=1 // pred_region
      _
    $region49: #{model_forward.3} parent=1 // pred_fallthru
      _
    %v43 = vld [vmem:[%s0] sm:$0xf]
    %v44 = vld [vmem:[%s0 + $0x4] sm:$0xf]
    %v45 = vld [vmem:[%s0 + $0x8] sm:$0xf]
    %v46 = vld [vmem:[%s0 + $0xc] sm:$0xf]
    %v47 = vld [vmem:[%s0 + $0x10] sm:$0xf]
    %v48 = vld [vmem:[%s0 + $0x14] sm:$0xf]
    %v49 = vld [vmem:[%s0 + $0x18] sm:$0xf]
    %v50 = vld [vmem:[%s0 + $0x1c] sm:$0xf]
    %v51 = vld [vmem:[%s0 + $0x20] sm:$0xf]
    %v52 = vld [vmem:[%s0 + $0x24] sm:$0xf]
    %v53 = vld [vmem:[%s0 + $0x28] sm:$0xf]
    %v54 = vld [vmem:[%s0 + $0x2c] sm:$0xf]
    %v55 = vld [vmem:[%s0 + $0x30] sm:$0xf]
    %v56 = vld [vmem:[%s0 + $0x34] sm:$0xf]
    %v57 = vld [vmem:[%s0 + $0x38] sm:$0xf]
    %v58 = vld [vmem:[%s0 + $0x3c] sm:$0xf]
    %v59 = vld [vmem:[%s1] sm:$0xff]
    %v60 = vld [vmem:[%s1 + $0x8] sm:$0xff]
    %v61 = vld [vmem:[%s1 + $0x10] sm:$0xff]
    %v62 = vld [vmem:[%s1 + $0x18] sm:$0xff]
    %v63 = vld [vmem:[%s1 + $0x20] sm:$0xff]
    %v64 = vld [vmem:[%s1 + $0x28] sm:$0xff]
    %v65 = vld [vmem:[%s1 + $0x30] sm:$0xff]
    %v66 = vld [vmem:[%s1 + $0x38] sm:$0xff]
    %v67 = vld [vmem:[%s1 + $0x40] sm:$0xff]
    %v68 = vld [vmem:[%s1 + $0x48] sm:$0xff]
    %v69 = vld [vmem:[%s1 + $0x50] sm:$0xff]
    %v70 = vld [vmem:[%s1 + $0x58] sm:$0xff]
    %v71 = vld [vmem:[%s1 + $0x60] sm:$0xff]
    %v72 = vld [vmem:[%s1 + $0x68] sm:$0xff]
    %v73 = vld [vmem:[%s1 + $0x70] sm:$0xff]
    %v74 = vld [vmem:[%s1 + $0x78] sm:$0xff]
    %v75 = vld [vmem:[%s3] sm:$0x1]
    %v77 = vlaneseq
    %v78 = vshrl.u32 %v77, 7
    %v79 = vsub.s32 0, %v78
    %v80 = vrot.slane %v75, %v79
    %v82 = vmul.f32 %v59, %v80
    %v83 = vmul.f32 %v60, %v80
    %v84 = vmul.f32 %v61, %v80
    %v85 = vmul.f32 %v62, %v80
    %v86 = vmul.f32 %v63, %v80
    %v87 = vmul.f32 %v64, %v80
    %v88 = vmul.f32 %v65, %v80
    %v89 = vmul.f32 %v66, %v80
    %v90 = vmul.f32 %v67, %v80
    %v91 = vmul.f32 %v68, %v80
    %v92 = vmul.f32 %v69, %v80
    %v93 = vmul.f32 %v70, %v80
    %v94 = vmul.f32 %v71, %v80
    %v95 = vmul.f32 %v72, %v80
    %v96 = vmul.f32 %v73, %v80
    %v97 = vmul.f32 %v74, %v80
    %v98 = vpack.c.bf16 %v83, %v82
    %v99 = vpack.c.bf16 %v85, %v84
    %v100 = vpack.c.bf16 %v87, %v86
    %v101 = vpack.c.bf16 %v89, %v88
    %v102 = vpack.c.bf16 %v91, %v90
    %v103 = vpack.c.bf16 %v93, %v92
    %v104 = vpack.c.bf16 %v95, %v94
    %v105 = vpack.c.bf16 %v97, %v96
    %v122 = vunpack.c.l.b16 %v43
    %v123 = vunpack.c.l.b16 %v44
    %v124 = vunpack.c.l.b16 %v45
    %v125 = vunpack.c.l.b16 %v46
    %v126 = vunpack.c.l.b16 %v47
    %v127 = vunpack.c.l.b16 %v48
    %v128 = vunpack.c.l.b16 %v49
    %v129 = vunpack.c.l.b16 %v50
    %v130 = vunpack.c.l.b16 %v51
    %v131 = vunpack.c.l.b16 %v52
    %v132 = vunpack.c.l.b16 %v53
    %v133 = vunpack.c.l.b16 %v54
    %v134 = vunpack.c.l.b16 %v55
    %v135 = vunpack.c.l.b16 %v56
    %v136 = vunpack.c.l.b16 %v57
    %v137 = vunpack.c.l.b16 %v58
    %v138 = vpack.c.b16 %v123, %v122
    %v139 = vpack.c.b16 %v125, %v124
    %v140 = vpack.c.b16 %v127, %v126
    %v141 = vpack.c.b16 %v129, %v128
    %v142 = vpack.c.b16 %v131, %v130
    %v143 = vpack.c.b16 %v133, %v132
    %v144 = vpack.c.b16 %v135, %v134
    %v145 = vpack.c.b16 %v137, %v136
    %154 = vmatprep.subr.bf16.mxu0 0
    %155 = vmatpush1.bf16.msra.mxu0 %v105
    %156 = vmatprep.subr.bf16.mxu0 0
    %157 = vmatpush1.bf16.msra.mxu0 %v104
    %158 = vmatprep.subr.bf16.mxu0 0
    %159 = vmatpush1.bf16.msra.mxu0 %v103
    %160 = vmatprep.subr.bf16.mxu0 0
    %161 = vmatpush1.bf16.msra.mxu0 %v102
    %162 = vmatprep.subr.bf16.mxu0 0
    %163 = vmatpush1.bf16.msra.mxu0 %v101
    %164 = vmatprep.subr.bf16.mxu0 0
    %165 = vmatpush1.bf16.msra.mxu0 %v100
    %166 = vmatprep.subr.bf16.mxu0 0
    %167 = vmatpush1.bf16.msra.mxu0 %v99
    %168 = vmatprep.subr.bf16.mxu0 0
    %169 = vmatpush1.bf16.msra.mxu0 %v98
    %170 = vmatprep.subr.bf16.mxu0 0
    %171 = vmatpush2.bf16.msra.mxu0 0
    %172 = vmatprep.subr.bf16.mxu0 0
    %173 = vmatpush2.bf16.msra.mxu0 0
    %174 = vmatprep.subr.bf16.mxu0 0
    %175 = vmatpush2.bf16.msra.mxu0 0
    %176 = vmatprep.subr.bf16.mxu0 0
    %177 = vmatpush2.bf16.msra.mxu0 0
    %178 = vmatprep.subr.bf16.mxu0 0
    %179 = vmatpush2.bf16.msra.mxu0 0
    %180 = vmatprep.subr.bf16.mxu0 0
    %181 = vmatpush2.bf16.msra.mxu0 0
    %182 = vmatprep.subr.bf16.mxu0 0
    %183 = vmatpush2.bf16.msra.mxu0 0
    %184 = vmatprep.subr.bf16.mxu0 0
    %185 = vmatpush2.bf16.msra.mxu0 0
    %186 = vmatprep.mubr.bf16.mxu0 0
    %187 = vmatmul.mubr.bf16.gmra.mxu0 %v138
    %v188 = vpop.f32.mrf.mxu0
    %v189 = vadd.f32 0.0, %v188
    %v190 = vpop.f32.mrf.mxu0
    %v191 = vpop.f32.mrf.mxu0
    %v192 = vadd.f32 0.0, %v191
    %v193 = vpop.f32.mrf.mxu0
    %194 = vmatprep.mubr.bf16.mxu0 0
    %195 = vmatmul.mubr.bf16.gmra.mxu0 %v139
    %v196 = vpop.f32.mrf.mxu0
    %v197 = vadd.f32 0.0, %v196
    %v198 = vpop.f32.mrf.mxu0
    %v199 = vpop.f32.mrf.mxu0
    %v200 = vadd.f32 0.0, %v199
    %v201 = vpop.f32.mrf.mxu0
    %202 = vmatprep.mubr.bf16.mxu0 0
    %203 = vmatmul.mubr.bf16.gmra.mxu0 %v140
    %v204 = vpop.f32.mrf.mxu0
    %v205 = vadd.f32 0.0, %v204
    %v206 = vpop.f32.mrf.mxu0
    %v207 = vpop.f32.mrf.mxu0
    %v208 = vadd.f32 0.0, %v207
    %v209 = vpop.f32.mrf.mxu0
    %210 = vmatprep.mubr.bf16.mxu0 0
    %211 = vmatmul.mubr.bf16.gmra.mxu0 %v141
    %v212 = vpop.f32.mrf.mxu0
    %v213 = vadd.f32 0.0, %v212
    %v214 = vpop.f32.mrf.mxu0
    %v215 = vpop.f32.mrf.mxu0
    %v216 = vadd.f32 0.0, %v215
    %v217 = vpop.f32.mrf.mxu0
    %218 = vmatprep.mubr.bf16.mxu0 0
    %219 = vmatmul.mubr.bf16.gmra.mxu0 %v142
    %v220 = vpop.f32.mrf.mxu0
    %v221 = vadd.f32 0.0, %v220
    %v222 = vpop.f32.mrf.mxu0
    %v223 = vpop.f32.mrf.mxu0
    %v224 = vadd.f32 0.0, %v223
    %v225 = vpop.f32.mrf.mxu0
    %226 = vmatprep.mubr.bf16.mxu0 0
    %227 = vmatmul.mubr.bf16.gmra.mxu0 %v143
    %v228 = vpop.f32.mrf.mxu0
    %v229 = vadd.f32 0.0, %v228
    %v230 = vpop.f32.mrf.mxu0
    %v231 = vpop.f32.mrf.mxu0
    %v232 = vadd.f32 0.0, %v231
    %v233 = vpop.f32.mrf.mxu0
    %234 = vmatprep.mubr.bf16.mxu0 0
    %235 = vmatmul.mubr.bf16.gmra.mxu0 %v144
    %v236 = vpop.f32.mrf.mxu0
    %v237 = vadd.f32 0.0, %v236
    %v238 = vpop.f32.mrf.mxu0
    %v239 = vpop.f32.mrf.mxu0
    %v240 = vadd.f32 0.0, %v239
    %v241 = vpop.f32.mrf.mxu0
    %242 = vmatprep.mubr.bf16.mxu0 0
    %243 = vmatmul.mubr.bf16.gmra.mxu0 %v145
    %v244 = vpop.f32.mrf.mxu0
    %v245 = vadd.f32 0.0, %v244
    %v246 = vpop.f32.mrf.mxu0
    %v247 = vpop.f32.mrf.mxu0
    %v248 = vadd.f32 0.0, %v247
    %v249 = vpop.f32.mrf.mxu0
    %250 = vdwg.mxu0
    %267 = vrot.lane.b32.xlu0 %v82, 32
    %v268 = vpop.permute.xlu0 %267
    %269 = vrot.lane.b32.xlu0 %v83, 32
    %v270 = vpop.permute.xlu0 %269
    %271 = vrot.lane.b32.xlu0 %v84, 32
    %v272 = vpop.permute.xlu0 %271
    %273 = vrot.lane.b32.xlu0 %v85, 32
    %v274 = vpop.permute.xlu0 %273
    %275 = vrot.lane.b32.xlu0 %v86, 32
    %v276 = vpop.permute.xlu0 %275
    %277 = vrot.lane.b32.xlu0 %v87, 32
    %v278 = vpop.permute.xlu0 %277
    %279 = vrot.lane.b32.xlu0 %v88, 32
    %v280 = vpop.permute.xlu0 %279
    %281 = vrot.lane.b32.xlu0 %v89, 32
    %v282 = vpop.permute.xlu0 %281
    %283 = vrot.lane.b32.xlu0 %v90, 32
    %v284 = vpop.permute.xlu0 %283
    %285 = vrot.lane.b32.xlu0 %v91, 32
    %v286 = vpop.permute.xlu0 %285
    %287 = vrot.lane.b32.xlu0 %v92, 32
    %v288 = vpop.permute.xlu0 %287
    %289 = vrot.lane.b32.xlu0 %v93, 32
    %v290 = vpop.permute.xlu0 %289
    %291 = vrot.lane.b32.xlu0 %v94, 32
    %v292 = vpop.permute.xlu0 %291
    %293 = vrot.lane.b32.xlu0 %v95, 32
    %v294 = vpop.permute.xlu0 %293
    %295 = vrot.lane.b32.xlu0 %v96, 32
    %v296 = vpop.permute.xlu0 %295
    %297 = vrot.lane.b32.xlu0 %v97, 32
    %v298 = vpop.permute.xlu0 %297
    %vm315 = vcmask 261120
    %v316 = vsel %vm315, %v189, %v268
    %v317 = vsel %vm315, %v192, %v270
    %v318 = vsel %vm315, %v197, %v272
    %v319 = vsel %vm315, %v200, %v274
    %v320 = vsel %vm315, %v205, %v276
    %v321 = vsel %vm315, %v208, %v278
    %v322 = vsel %vm315, %v213, %v280
    %v323 = vsel %vm315, %v216, %v282
    %v324 = vsel %vm315, %v221, %v284
    %v325 = vsel %vm315, %v224, %v286
    %v326 = vsel %vm315, %v229, %v288
    %v327 = vsel %vm315, %v232, %v290
    %v328 = vsel %vm315, %v237, %v292
    %v329 = vsel %vm315, %v240, %v294
    %v330 = vsel %vm315, %v245, %v296
    %v331 = vsel %vm315, %v248, %v298
    %v332 = vpack.c.bf16 %v317, %v316
    %v333 = vpack.c.bf16 %v319, %v318
    %v334 = vpack.c.bf16 %v321, %v320
    %v335 = vpack.c.bf16 %v323, %v322
    %v336 = vpack.c.bf16 %v325, %v324
    %v337 = vpack.c.bf16 %v327, %v326
    %v338 = vpack.c.bf16 %v329, %v328
    %v339 = vpack.c.bf16 %v331, %v330
    %v340 = vld [vmem:[%s5] sm:$0xf]
    %v341 = vld [vmem:[%s5 + $0x4] sm:$0xf]
    %v342 = vld [vmem:[%s5 + $0x8] sm:$0xf]
    %v343 = vld [vmem:[%s5 + $0xc] sm:$0xf]
    %v344 = vld [vmem:[%s5 + $0x10] sm:$0xf]
    %v345 = vld [vmem:[%s5 + $0x14] sm:$0xf]
    %v346 = vld [vmem:[%s5 + $0x18] sm:$0xf]
    %v347 = vld [vmem:[%s5 + $0x1c] sm:$0xf]
    %v348 = vld [vmem:[%s6] sm:$0x1]
    %v350 = vlaneseq
    %v351 = vshrl.u32 %v350, 7
    %v352 = vsub.s32 0, %v351
    %v353 = vrot.slane %v348, %v352
    %v363 = vunpack.c.l.b16 %v340
    %v364 = vunpack.c.l.b16 %v341
    %v365 = vunpack.c.l.b16 %v342
    %v366 = vunpack.c.l.b16 %v343
    %v367 = vunpack.c.l.b16 %v344
    %v368 = vunpack.c.l.b16 %v345
    %v369 = vunpack.c.l.b16 %v346
    %v370 = vunpack.c.l.b16 %v347
    %v371 = vpack.c.b16 %v364, %v363
    %v372 = vpack.c.b16 %v366, %v365
    %v373 = vpack.c.b16 %v368, %v367
    %v374 = vpack.c.b16 %v370, %v369
    %vm379 = vcmask 523264
    %v381 = vsel %vm379, %v332, 0
    %v384 = vsel %vm379, %v333, 0
    %v387 = vsel %vm379, %v334, 0
    %v390 = vsel %vm379, %v335, 0
    %v393 = vsel %vm379, %v336, 0
    %v396 = vsel %vm379, %v337, 0
    %v399 = vsel %vm379, %v338, 0
    %v402 = vsel %vm379, %v339, 0
    %404 = vmatprep.subr.bf16.mxu0 0
    %405 = vmatpush1.bf16.msra.mxu0 0
    %406 = vmatprep.subr.bf16.mxu0 0
    %407 = vmatpush1.bf16.msra.mxu0 0
    %408 = vmatprep.subr.bf16.mxu0 0
    %409 = vmatpush1.bf16.msra.mxu0 0
    %410 = vmatprep.subr.bf16.mxu0 0
    %411 = vmatpush1.bf16.msra.mxu0 0
    %412 = vmatprep.subr.bf16.mxu0 0
    %413 = vmatpush1.bf16.msra.mxu0 %v374
    %414 = vmatprep.subr.bf16.mxu0 0
    %415 = vmatpush1.bf16.msra.mxu0 %v373
    %416 = vmatprep.subr.bf16.mxu0 0
    %417 = vmatpush1.bf16.msra.mxu0 %v372
    %418 = vmatprep.subr.bf16.mxu0 0
    %419 = vmatpush1.bf16.msra.mxu0 %v371
    %420 = vmatprep.subr.bf16.mxu0 0
    %421 = vmatpush2.bf16.msra.mxu0 0
    %422 = vmatprep.subr.bf16.mxu0 0
    %423 = vmatpush2.bf16.msra.mxu0 0
    %424 = vmatprep.subr.bf16.mxu0 0
    %425 = vmatpush2.bf16.msra.mxu0 0
    %426 = vmatprep.subr.bf16.mxu0 0
    %427 = vmatpush2.bf16.msra.mxu0 0
    %428 = vmatprep.subr.bf16.mxu0 0
    %429 = vmatpush2.bf16.msra.mxu0 0
    %430 = vmatprep.subr.bf16.mxu0 0
    %431 = vmatpush2.bf16.msra.mxu0 0
    %432 = vmatprep.subr.bf16.mxu0 0
    %433 = vmatpush2.bf16.msra.mxu0 0
    %434 = vmatprep.subr.bf16.mxu0 0
    %435 = vmatpush2.bf16.msra.mxu0 0
    %436 = vmatprep.mubr.bf16.mxu0 0
    %437 = vmatmul.mubr.bf16.gmra.mxu0 %v381
    %v438 = vpop.f32.mrf.mxu0
    %v439 = vadd.f32 %v353, %v438
    %v440 = vpop.f32.mrf.mxu0
    %v441 = vpop.f32.mrf.mxu0
    %v442 = vadd.f32 %v353, %v441
    %v443 = vpop.f32.mrf.mxu0
    %444 = vmatprep.mubr.bf16.mxu0 0
    %445 = vmatmul.mubr.bf16.gmra.mxu0 %v384
    %v446 = vpop.f32.mrf.mxu0
    %v447 = vadd.f32 %v353, %v446
    %v448 = vpop.f32.mrf.mxu0
    %v449 = vpop.f32.mrf.mxu0
    %v450 = vadd.f32 %v353, %v449
    %v451 = vpop.f32.mrf.mxu0
    %452 = vmatprep.mubr.bf16.mxu0 0
    %453 = vmatmul.mubr.bf16.gmra.mxu0 %v387
    %v454 = vpop.f32.mrf.mxu0
    %v455 = vadd.f32 %v353, %v454
    %v456 = vpop.f32.mrf.mxu0
    %v457 = vpop.f32.mrf.mxu0
    %v458 = vadd.f32 %v353, %v457
    %v459 = vpop.f32.mrf.mxu0
    %460 = vmatprep.mubr.bf16.mxu0 0
    %461 = vmatmul.mubr.bf16.gmra.mxu0 %v390
    %v462 = vpop.f32.mrf.mxu0
    %v463 = vadd.f32 %v353, %v462
    %v464 = vpop.f32.mrf.mxu0
    %v465 = vpop.f32.mrf.mxu0
    %v466 = vadd.f32 %v353, %v465
    %v467 = vpop.f32.mrf.mxu0
    %468 = vmatprep.mubr.bf16.mxu0 0
    %469 = vmatmul.mubr.bf16.gmra.mxu0 %v393
    %v470 = vpop.f32.mrf.mxu0
    %v471 = vadd.f32 %v353, %v470
    %v472 = vpop.f32.mrf.mxu0
    %v473 = vpop.f32.mrf.mxu0
    %v474 = vadd.f32 %v353, %v473
    %v475 = vpop.f32.mrf.mxu0
    %476 = vmatprep.mubr.bf16.mxu0 0
    %477 = vmatmul.mubr.bf16.gmra.mxu0 %v396
    %v478 = vpop.f32.mrf.mxu0
    %v479 = vadd.f32 %v353, %v478
    %v480 = vpop.f32.mrf.mxu0
    %v481 = vpop.f32.mrf.mxu0
    %v482 = vadd.f32 %v353, %v481
    %v483 = vpop.f32.mrf.mxu0
    %484 = vmatprep.mubr.bf16.mxu0 0
    %485 = vmatmul.mubr.bf16.gmra.mxu0 %v399
    %v486 = vpop.f32.mrf.mxu0
    %v487 = vadd.f32 %v353, %v486
    %v488 = vpop.f32.mrf.mxu0
    %v489 = vpop.f32.mrf.mxu0
    %v490 = vadd.f32 %v353, %v489
    %v491 = vpop.f32.mrf.mxu0
    %492 = vmatprep.mubr.bf16.mxu0 0
    %493 = vmatmul.mubr.bf16.gmra.mxu0 %v402
    %v494 = vpop.f32.mrf.mxu0
    %v495 = vadd.f32 %v353, %v494
    %v496 = vpop.f32.mrf.mxu0
    %v497 = vpop.f32.mrf.mxu0
    %v498 = vadd.f32 %v353, %v497
    %v499 = vpop.f32.mrf.mxu0
    %500 = vdwg.mxu0
    %v501 = vmax.f32 %v439, 0.0
    %v502 = vmax.f32 %v442, 0.0
    %v503 = vmax.f32 %v447, 0.0
    %v504 = vmax.f32 %v450, 0.0
    %v505 = vmax.f32 %v455, 0.0
    %v506 = vmax.f32 %v458, 0.0
    %v507 = vmax.f32 %v463, 0.0
    %v508 = vmax.f32 %v466, 0.0
    %v509 = vmax.f32 %v471, 0.0
    %v510 = vmax.f32 %v474, 0.0
    %v511 = vmax.f32 %v479, 0.0
    %v512 = vmax.f32 %v482, 0.0
    %v513 = vmax.f32 %v487, 0.0
    %v514 = vmax.f32 %v490, 0.0
    %v515 = vmax.f32 %v495, 0.0
    %v516 = vmax.f32 %v498, 0.0
    %v517 = vld [vmem:[%s4] sm:$0xff]
    %v518 = vld [vmem:[%s4 + $0x8] sm:$0xff]
    %v519 = vld [vmem:[%s4 + $0x10] sm:$0xff]
    %v520 = vld [vmem:[%s4 + $0x18] sm:$0xff]
    %v521 = vld [vmem:[%s4 + $0x20] sm:$0xff]
    %v522 = vld [vmem:[%s4 + $0x28] sm:$0xff]
    %v523 = vld [vmem:[%s4 + $0x30] sm:$0xff]
    %v524 = vld [vmem:[%s4 + $0x38] sm:$0xff]
    %v525 = vld [vmem:[%s4 + $0x40] sm:$0xff]
    %v526 = vld [vmem:[%s4 + $0x48] sm:$0xff]
    %v527 = vld [vmem:[%s4 + $0x50] sm:$0xff]
    %v528 = vld [vmem:[%s4 + $0x58] sm:$0xff]
    %v529 = vld [vmem:[%s4 + $0x60] sm:$0xff]
    %v530 = vld [vmem:[%s4 + $0x68] sm:$0xff]
    %v531 = vld [vmem:[%s4 + $0x70] sm:$0xff]
    %v532 = vld [vmem:[%s4 + $0x78] sm:$0xff]
    %v533 = vmul.f32 %v501, %v517
    %v534 = vmul.f32 %v502, %v518
    %v535 = vmul.f32 %v503, %v519
    %v536 = vmul.f32 %v504, %v520
    %v537 = vmul.f32 %v505, %v521
    %v538 = vmul.f32 %v506, %v522
    %v539 = vmul.f32 %v507, %v523
    %v540 = vmul.f32 %v508, %v524
    %v541 = vmul.f32 %v509, %v525
    %v542 = vmul.f32 %v510, %v526
    %v543 = vmul.f32 %v511, %v527
    %v544 = vmul.f32 %v512, %v528
    %v545 = vmul.f32 %v513, %v529
    %v546 = vmul.f32 %v514, %v530
    %v547 = vmul.f32 %v515, %v531
    %v548 = vmul.f32 %v516, %v532
    %v549 = vmul.f32 %v533, 2.0
    %v550 = vmul.f32 %v534, 2.0
    %v551 = vmul.f32 %v535, 2.0
    %v552 = vmul.f32 %v536, 2.0
    %v553 = vmul.f32 %v537, 2.0
    %v554 = vmul.f32 %v538, 2.0
    %v555 = vmul.f32 %v539, 2.0
    %v556 = vmul.f32 %v540, 2.0
    %v557 = vmul.f32 %v541, 2.0
    %v558 = vmul.f32 %v542, 2.0
    %v559 = vmul.f32 %v543, 2.0
    %v560 = vmul.f32 %v544, 2.0
    %v561 = vmul.f32 %v545, 2.0
    %v562 = vmul.f32 %v546, 2.0
    %v563 = vmul.f32 %v547, 2.0
    %v564 = vmul.f32 %v548, 2.0
    %v565 = vpack.c.bf16 %v550, %v549
    %v566 = vpack.c.bf16 %v552, %v551
    %v567 = vpack.c.bf16 %v554, %v553
    %v568 = vpack.c.bf16 %v556, %v555
    %v569 = vpack.c.bf16 %v558, %v557
    %v570 = vpack.c.bf16 %v560, %v559
    %v571 = vpack.c.bf16 %v562, %v561
    %v572 = vpack.c.bf16 %v564, %v563
    %v573 = vld [vmem:[%s7] sm:$0xf]
    %v574 = vld [vmem:[%s7 + $0x4] sm:$0xf]
    %v575 = vld [vmem:[%s7 + $0x8] sm:$0xf]
    %v576 = vld [vmem:[%s7 + $0xc] sm:$0xf]
    %v577 = vld [vmem:[%s7 + $0x10] sm:$0xf]
    %v578 = vld [vmem:[%s7 + $0x14] sm:$0xf]
    %v579 = vld [vmem:[%s7 + $0x18] sm:$0xf]
    %v580 = vld [vmem:[%s7 + $0x1c] sm:$0xf]
    %v581 = vld [vmem:[%s7 + $0x20] sm:$0xf]
    %v582 = vld [vmem:[%s7 + $0x24] sm:$0xf]
    %v583 = vld [vmem:[%s7 + $0x28] sm:$0xf]
    %v584 = vld [vmem:[%s7 + $0x2c] sm:$0xf]
    %v585 = vld [vmem:[%s7 + $0x30] sm:$0xf]
    %v586 = vld [vmem:[%s7 + $0x34] sm:$0xf]
    %v587 = vld [vmem:[%s7 + $0x38] sm:$0xf]
    %v588 = vld [vmem:[%s7 + $0x3c] sm:$0xf]
    %v605 = vunpack.c.l.b16 %v573
    %v606 = vunpack.c.l.b16 %v574
    %v607 = vunpack.c.l.b16 %v575
    %v608 = vunpack.c.l.b16 %v576
    %v609 = vunpack.c.l.b16 %v577
    %v610 = vunpack.c.l.b16 %v578
    %v611 = vunpack.c.l.b16 %v579
    %v612 = vunpack.c.l.b16 %v580
    %v613 = vunpack.c.l.b16 %v581
    %v614 = vunpack.c.l.b16 %v582
    %v615 = vunpack.c.l.b16 %v583
    %v616 = vunpack.c.l.b16 %v584
    %v617 = vunpack.c.l.b16 %v585
    %v618 = vunpack.c.l.b16 %v586
    %v619 = vunpack.c.l.b16 %v587
    %v620 = vunpack.c.l.b16 %v588
    %v621 = vpack.c.b16 %v606, %v605
    %v622 = vpack.c.b16 %v608, %v607
    %v623 = vpack.c.b16 %v610, %v609
    %v624 = vpack.c.b16 %v612, %v611
    %v625 = vpack.c.b16 %v614, %v613
    %v626 = vpack.c.b16 %v616, %v615
    %v627 = vpack.c.b16 %v618, %v617
    %v628 = vpack.c.b16 %v620, %v619
    %637 = vmatprep.subr.bf16.mxu0 0
    %638 = vmatpush1.bf16.msra.mxu0 %v628
    %639 = vmatprep.subr.bf16.mxu0 0
    %640 = vmatpush1.bf16.msra.mxu0 %v627
    %641 = vmatprep.subr.bf16.mxu0 0
    %642 = vmatpush1.bf16.msra.mxu0 %v626
    %643 = vmatprep.subr.bf16.mxu0 0
    %644 = vmatpush1.bf16.msra.mxu0 %v625
    %645 = vmatprep.subr.bf16.mxu0 0
    %646 = vmatpush1.bf16.msra.mxu0 %v624
    %647 = vmatprep.subr.bf16.mxu0 0
    %648 = vmatpush1.bf16.msra.mxu0 %v623
    %649 = vmatprep.subr.bf16.mxu0 0
    %650 = vmatpush1.bf16.msra.mxu0 %v622
    %651 = vmatprep.subr.bf16.mxu0 0
    %652 = vmatpush1.bf16.msra.mxu0 %v621
    %653 = vmatprep.subr.bf16.mxu0 0
    %654 = vmatpush2.bf16.msra.mxu0 0
    %655 = vmatprep.subr.bf16.mxu0 0
    %656 = vmatpush2.bf16.msra.mxu0 0
    %657 = vmatprep.subr.bf16.mxu0 0
    %658 = vmatpush2.bf16.msra.mxu0 0
    %659 = vmatprep.subr.bf16.mxu0 0
    %660 = vmatpush2.bf16.msra.mxu0 0
    %661 = vmatprep.subr.bf16.mxu0 0
    %662 = vmatpush2.bf16.msra.mxu0 0
    %663 = vmatprep.subr.bf16.mxu0 0
    %664 = vmatpush2.bf16.msra.mxu0 0
    %665 = vmatprep.subr.bf16.mxu0 0
    %666 = vmatpush2.bf16.msra.mxu0 0
    %667 = vmatprep.subr.bf16.mxu0 0
    %668 = vmatpush2.bf16.msra.mxu0 0
    %669 = vmatprep.mubr.bf16.mxu0 0
    %670 = vmatmul.mubr.bf16.gmra.mxu0 %v565
    %v671 = vpop.f32.mrf.mxu0
    %v672 = vadd.f32 0.0, %v671
    %v673 = vpop.f32.mrf.mxu0
    %v674 = vpop.f32.mrf.mxu0
    %v675 = vadd.f32 0.0, %v674
    %v676 = vpop.f32.mrf.mxu0
    %677 = vmatprep.mubr.bf16.mxu0 0
    %678 = vmatmul.mubr.bf16.gmra.mxu0 %v566
    %v679 = vpop.f32.mrf.mxu0
    %v680 = vadd.f32 0.0, %v679
    %v681 = vpop.f32.mrf.mxu0
    %v682 = vpop.f32.mrf.mxu0
    %v683 = vadd.f32 0.0, %v682
    %v684 = vpop.f32.mrf.mxu0
    %685 = vmatprep.mubr.bf16.mxu0 0
    %686 = vmatmul.mubr.bf16.gmra.mxu0 %v567
    %v687 = vpop.f32.mrf.mxu0
    %v688 = vadd.f32 0.0, %v687
    %v689 = vpop.f32.mrf.mxu0
    %v690 = vpop.f32.mrf.mxu0
    %v691 = vadd.f32 0.0, %v690
    %v692 = vpop.f32.mrf.mxu0
    %693 = vmatprep.mubr.bf16.mxu0 0
    %694 = vmatmul.mubr.bf16.gmra.mxu0 %v568
    %v695 = vpop.f32.mrf.mxu0
    %v696 = vadd.f32 0.0, %v695
    %v697 = vpop.f32.mrf.mxu0
    %v698 = vpop.f32.mrf.mxu0
    %v699 = vadd.f32 0.0, %v698
    %v700 = vpop.f32.mrf.mxu0
    %701 = vmatprep.mubr.bf16.mxu0 0
    %702 = vmatmul.mubr.bf16.gmra.mxu0 %v569
    %v703 = vpop.f32.mrf.mxu0
    %v704 = vadd.f32 0.0, %v703
    %v705 = vpop.f32.mrf.mxu0
    %v706 = vpop.f32.mrf.mxu0
    %v707 = vadd.f32 0.0, %v706
    %v708 = vpop.f32.mrf.mxu0
    %709 = vmatprep.mubr.bf16.mxu0 0
    %710 = vmatmul.mubr.bf16.gmra.mxu0 %v570
    %v711 = vpop.f32.mrf.mxu0
    %v712 = vadd.f32 0.0, %v711
    %v713 = vpop.f32.mrf.mxu0
    %v714 = vpop.f32.mrf.mxu0
    %v715 = vadd.f32 0.0, %v714
    %v716 = vpop.f32.mrf.mxu0
    %717 = vmatprep.mubr.bf16.mxu0 0
    %718 = vmatmul.mubr.bf16.gmra.mxu0 %v571
    %v719 = vpop.f32.mrf.mxu0
    %v720 = vadd.f32 0.0, %v719
    %v721 = vpop.f32.mrf.mxu0
    %v722 = vpop.f32.mrf.mxu0
    %v723 = vadd.f32 0.0, %v722
    %v724 = vpop.f32.mrf.mxu0
    %725 = vmatprep.mubr.bf16.mxu0 0
    %726 = vmatmul.mubr.bf16.gmra.mxu0 %v572
    %v727 = vpop.f32.mrf.mxu0
    %v728 = vadd.f32 0.0, %v727
    %v729 = vpop.f32.mrf.mxu0
    %v730 = vpop.f32.mrf.mxu0
    %v731 = vadd.f32 0.0, %v730
    %v732 = vpop.f32.mrf.mxu0
    %733 = vdwg.mxu0
    %v734 = vpack.c.bf16 %v675, %v672
    %v735 = vpack.c.bf16 %v683, %v680
    %v736 = vpack.c.bf16 %v691, %v688
    %v737 = vpack.c.bf16 %v699, %v696
    %v738 = vpack.c.bf16 %v707, %v704
    %v739 = vpack.c.bf16 %v715, %v712
    %v740 = vpack.c.bf16 %v723, %v720
    %v741 = vpack.c.bf16 %v731, %v728
    %v742 = vld [vmem:[%s8] sm:$0xf]
    %v743 = vld [vmem:[%s8 + $0x4] sm:$0xf]
    %v744 = vld [vmem:[%s8 + $0x8] sm:$0xf]
    %v745 = vld [vmem:[%s8 + $0xc] sm:$0xf]
    %v746 = vld [vmem:[%s8 + $0x10] sm:$0xf]
    %v747 = vld [vmem:[%s8 + $0x14] sm:$0xf]
    %v748 = vld [vmem:[%s8 + $0x18] sm:$0xf]
    %v749 = vld [vmem:[%s8 + $0x1c] sm:$0xf]
    %v750 = vld [vmem:[%s8 + $0x20] sm:$0xf]
    %v751 = vld [vmem:[%s8 + $0x24] sm:$0xf]
    %v752 = vld [vmem:[%s8 + $0x28] sm:$0xf]
    %v753 = vld [vmem:[%s8 + $0x2c] sm:$0xf]
    %v754 = vld [vmem:[%s8 + $0x30] sm:$0xf]
    %v755 = vld [vmem:[%s8 + $0x34] sm:$0xf]
    %v756 = vld [vmem:[%s8 + $0x38] sm:$0xf]
    %v757 = vld [vmem:[%s8 + $0x3c] sm:$0xf]
    %v774 = vunpack.c.l.b16 %v742
    %v775 = vunpack.c.l.b16 %v743
    %v776 = vunpack.c.l.b16 %v744
    %v777 = vunpack.c.l.b16 %v745
    %v778 = vunpack.c.l.b16 %v746
    %v779 = vunpack.c.l.b16 %v747
    %v780 = vunpack.c.l.b16 %v748
    %v781 = vunpack.c.l.b16 %v749
    %v782 = vunpack.c.l.b16 %v750
    %v783 = vunpack.c.l.b16 %v751
    %v784 = vunpack.c.l.b16 %v752
    %v785 = vunpack.c.l.b16 %v753
    %v786 = vunpack.c.l.b16 %v754
    %v787 = vunpack.c.l.b16 %v755
    %v788 = vunpack.c.l.b16 %v756
    %v789 = vunpack.c.l.b16 %v757
    %v790 = vpack.c.b16 %v775, %v774
    %v791 = vpack.c.b16 %v777, %v776
    %v792 = vpack.c.b16 %v779, %v778
    %v793 = vpack.c.b16 %v781, %v780
    %v794 = vpack.c.b16 %v783, %v782
    %v795 = vpack.c.b16 %v785, %v784
    %v796 = vpack.c.b16 %v787, %v786
    %v797 = vpack.c.b16 %v789, %v788
    %806 = vmatprep.subr.bf16.mxu0 0
    %807 = vmatpush1.bf16.msra.mxu0 %v797
    %808 = vmatprep.subr.bf16.mxu0 0
    %809 = vmatpush1.bf16.msra.mxu0 %v796
    %810 = vmatprep.subr.bf16.mxu0 0
    %811 = vmatpush1.bf16.msra.mxu0 %v795
    %812 = vmatprep.subr.bf16.mxu0 0
    %813 = vmatpush1.bf16.msra.mxu0 %v794
    %814 = vmatprep.subr.bf16.mxu0 0
    %815 = vmatpush1.bf16.msra.mxu0 %v793
    %816 = vmatprep.subr.bf16.mxu0 0
    %817 = vmatpush1.bf16.msra.mxu0 %v792
    %818 = vmatprep.subr.bf16.mxu0 0
    %819 = vmatpush1.bf16.msra.mxu0 %v791
    %820 = vmatprep.subr.bf16.mxu0 0
    %821 = vmatpush1.bf16.msra.mxu0 %v790
    %822 = vmatprep.subr.bf16.mxu0 0
    %823 = vmatpush2.bf16.msra.mxu0 0
    %824 = vmatprep.subr.bf16.mxu0 0
    %825 = vmatpush2.bf16.msra.mxu0 0
    %826 = vmatprep.subr.bf16.mxu0 0
    %827 = vmatpush2.bf16.msra.mxu0 0
    %828 = vmatprep.subr.bf16.mxu0 0
    %829 = vmatpush2.bf16.msra.mxu0 0
    %830 = vmatprep.subr.bf16.mxu0 0
    %831 = vmatpush2.bf16.msra.mxu0 0
    %832 = vmatprep.subr.bf16.mxu0 0
    %833 = vmatpush2.bf16.msra.mxu0 0
    %834 = vmatprep.subr.bf16.mxu0 0
    %835 = vmatpush2.bf16.msra.mxu0 0
    %836 = vmatprep.subr.bf16.mxu0 0
    %837 = vmatpush2.bf16.msra.mxu0 0
    %838 = vmatprep.mubr.bf16.mxu0 0
    %839 = vmatmul.mubr.bf16.gmra.mxu0 %v565
    %v840 = vpop.f32.mrf.mxu0
    %v841 = vadd.f32 0.0, %v840
    %v842 = vpop.f32.mrf.mxu0
    %v843 = vpop.f32.mrf.mxu0
    %v844 = vadd.f32 0.0, %v843
    %v845 = vpop.f32.mrf.mxu0
    %846 = vmatprep.mubr.bf16.mxu0 0
    %847 = vmatmul.mubr.bf16.gmra.mxu0 %v566
    %v848 = vpop.f32.mrf.mxu0
    %v849 = vadd.f32 0.0, %v848
    %v850 = vpop.f32.mrf.mxu0
    %v851 = vpop.f32.mrf.mxu0
    %v852 = vadd.f32 0.0, %v851
    %v853 = vpop.f32.mrf.mxu0
    %854 = vmatprep.mubr.bf16.mxu0 0
    %855 = vmatmul.mubr.bf16.gmra.mxu0 %v567
    %v856 = vpop.f32.mrf.mxu0
    %v857 = vadd.f32 0.0, %v856
    %v858 = vpop.f32.mrf.mxu0
    %v859 = vpop.f32.mrf.mxu0
    %v860 = vadd.f32 0.0, %v859
    %v861 = vpop.f32.mrf.mxu0
    %862 = vmatprep.mubr.bf16.mxu0 0
    %863 = vmatmul.mubr.bf16.gmra.mxu0 %v568
    %v864 = vpop.f32.mrf.mxu0
    %v865 = vadd.f32 0.0, %v864
    %v866 = vpop.f32.mrf.mxu0
    %v867 = vpop.f32.mrf.mxu0
    %v868 = vadd.f32 0.0, %v867
    %v869 = vpop.f32.mrf.mxu0
    %870 = vmatprep.mubr.bf16.mxu0 0
    %871 = vmatmul.mubr.bf16.gmra.mxu0 %v569
    %v872 = vpop.f32.mrf.mxu0
    %v873 = vadd.f32 0.0, %v872
    %v874 = vpop.f32.mrf.mxu0
    %v875 = vpop.f32.mrf.mxu0
    %v876 = vadd.f32 0.0, %v875
    %v877 = vpop.f32.mrf.mxu0
    %878 = vmatprep.mubr.bf16.mxu0 0
    %879 = vmatmul.mubr.bf16.gmra.mxu0 %v570
    %v880 = vpop.f32.mrf.mxu0
    %v881 = vadd.f32 0.0, %v880
    %v882 = vpop.f32.mrf.mxu0
    %v883 = vpop.f32.mrf.mxu0
    %v884 = vadd.f32 0.0, %v883
    %v885 = vpop.f32.mrf.mxu0
    %886 = vmatprep.mubr.bf16.mxu0 0
    %887 = vmatmul.mubr.bf16.gmra.mxu0 %v571
    %v888 = vpop.f32.mrf.mxu0
    %v889 = vadd.f32 0.0, %v888
    %v890 = vpop.f32.mrf.mxu0
    %v891 = vpop.f32.mrf.mxu0
    %v892 = vadd.f32 0.0, %v891
    %v893 = vpop.f32.mrf.mxu0
    %894 = vmatprep.mubr.bf16.mxu0 0
    %895 = vmatmul.mubr.bf16.gmra.mxu0 %v572
    %v896 = vpop.f32.mrf.mxu0
    %v897 = vadd.f32 0.0, %v896
    %v898 = vpop.f32.mrf.mxu0
    %v899 = vpop.f32.mrf.mxu0
    %v900 = vadd.f32 0.0, %v899
    %v901 = vpop.f32.mrf.mxu0
    %902 = vdwg.mxu0
    %903 = vmatprep.subr.bf16.mxu0 0
    %904 = vmatpush1.bf16.msra.mxu0 %v741
    %905 = vmatprep.subr.bf16.mxu0 0
    %906 = vmatpush1.bf16.msra.mxu0 %v740
    %907 = vmatprep.subr.bf16.mxu0 0
    %908 = vmatpush1.bf16.msra.mxu0 %v739
    %909 = vmatprep.subr.bf16.mxu0 0
    %910 = vmatpush1.bf16.msra.mxu0 %v738
    %911 = vmatprep.subr.bf16.mxu0 0
    %912 = vmatpush1.bf16.msra.mxu0 %v737
    %913 = vmatprep.subr.bf16.mxu0 0
    %914 = vmatpush1.bf16.msra.mxu0 %v736
    %915 = vmatprep.subr.bf16.mxu0 0
    %916 = vmatpush1.bf16.msra.mxu0 %v735
    %917 = vmatprep.subr.bf16.mxu0 0
    %918 = vmatpush1.bf16.msra.mxu0 %v734
    %919 = vmatprep.subr.bf16.mxu0 0
    %920 = vmatpush2.bf16.msra.mxu0 0
    %921 = vmatprep.subr.bf16.mxu0 0
    %922 = vmatpush2.bf16.msra.mxu0 0
    %923 = vmatprep.subr.bf16.mxu0 0
    %924 = vmatpush2.bf16.msra.mxu0 0
    %925 = vmatprep.subr.bf16.mxu0 0
    %926 = vmatpush2.bf16.msra.mxu0 0
    %927 = vmatprep.subr.bf16.mxu0 0
    %928 = vmatpush2.bf16.msra.mxu0 0
    %929 = vmatprep.subr.bf16.mxu0 0
    %930 = vmatpush2.bf16.msra.mxu0 0
    %931 = vmatprep.subr.bf16.mxu0 0
    %932 = vmatpush2.bf16.msra.mxu0 0
    %933 = vmatprep.subr.bf16.mxu0 0
    %934 = vmatpush2.bf16.msra.mxu0 0
    %935 = vmatprep.mubr.bf16.mxu0 0
    %936 = vmatmul.mubr.bf16.gmra.mxu0 %v138
    %v937 = vpop.f32.mrf.mxu0
    %v938 = vadd.f32 %v841, %v937
    %v939 = vpop.f32.mrf.mxu0
    %v940 = vpop.f32.mrf.mxu0
    %v941 = vadd.f32 %v844, %v940
    %v942 = vpop.f32.mrf.mxu0
    %943 = vmatprep.mubr.bf16.mxu0 0
    %944 = vmatmul.mubr.bf16.gmra.mxu0 %v139
    %v945 = vpop.f32.mrf.mxu0
    %v946 = vadd.f32 %v849, %v945
    %v947 = vpop.f32.mrf.mxu0
    %v948 = vpop.f32.mrf.mxu0
    %v949 = vadd.f32 %v852, %v948
    %v950 = vpop.f32.mrf.mxu0
    %951 = vmatprep.mubr.bf16.mxu0 0
    %952 = vmatmul.mubr.bf16.gmra.mxu0 %v140
    %v953 = vpop.f32.mrf.mxu0
    %v954 = vadd.f32 %v857, %v953
    %v955 = vpop.f32.mrf.mxu0
    %v956 = vpop.f32.mrf.mxu0
    %v957 = vadd.f32 %v860, %v956
    %v958 = vpop.f32.mrf.mxu0
    %959 = vmatprep.mubr.bf16.mxu0 0
    %960 = vmatmul.mubr.bf16.gmra.mxu0 %v141
    %v961 = vpop.f32.mrf.mxu0
    %v962 = vadd.f32 %v865, %v961
    %v963 = vpop.f32.mrf.mxu0
    %v964 = vpop.f32.mrf.mxu0
    %v965 = vadd.f32 %v868, %v964
    %v966 = vpop.f32.mrf.mxu0
    %967 = vmatprep.mubr.bf16.mxu0 0
    %968 = vmatmul.mubr.bf16.gmra.mxu0 %v142
    %v969 = vpop.f32.mrf.mxu0
    %v970 = vadd.f32 %v873, %v969
    %v971 = vpop.f32.mrf.mxu0
    %v972 = vpop.f32.mrf.mxu0
    %v973 = vadd.f32 %v876, %v972
    %v974 = vpop.f32.mrf.mxu0
    %975 = vmatprep.mubr.bf16.mxu0 0
    %976 = vmatmul.mubr.bf16.gmra.mxu0 %v143
    %v977 = vpop.f32.mrf.mxu0
    %v978 = vadd.f32 %v881, %v977
    %v979 = vpop.f32.mrf.mxu0
    %v980 = vpop.f32.mrf.mxu0
    %v981 = vadd.f32 %v884, %v980
    %v982 = vpop.f32.mrf.mxu0
    %983 = vmatprep.mubr.bf16.mxu0 0
    %984 = vmatmul.mubr.bf16.gmra.mxu0 %v144
    %v985 = vpop.f32.mrf.mxu0
    %v986 = vadd.f32 %v889, %v985
    %v987 = vpop.f32.mrf.mxu0
    %v988 = vpop.f32.mrf.mxu0
    %v989 = vadd.f32 %v892, %v988
    %v990 = vpop.f32.mrf.mxu0
    %991 = vmatprep.mubr.bf16.mxu0 0
    %992 = vmatmul.mubr.bf16.gmra.mxu0 %v145
    %v993 = vpop.f32.mrf.mxu0
    %v994 = vadd.f32 %v897, %v993
    %v995 = vpop.f32.mrf.mxu0
    %v996 = vpop.f32.mrf.mxu0
    %v997 = vadd.f32 %v900, %v996
    %v998 = vpop.f32.mrf.mxu0
    %999 = vdwg.mxu0
    %v1000 = vld [vmem:[%s9] sm:$0x1]
    %v1002 = vlaneseq
    %v1003 = vshrl.u32 %v1002, 7
    %v1004 = vsub.s32 0, %v1003
    %v1005 = vrot.slane %v1000, %v1004
    %v1007 = vadd.f32 %v938, %v1005
    %v1008 = vadd.f32 %v941, %v1005
    %v1009 = vadd.f32 %v946, %v1005
    %v1010 = vadd.f32 %v949, %v1005
    %v1011 = vadd.f32 %v954, %v1005
    %v1012 = vadd.f32 %v957, %v1005
    %v1013 = vadd.f32 %v962, %v1005
    %v1014 = vadd.f32 %v965, %v1005
    %v1015 = vadd.f32 %v970, %v1005
    %v1016 = vadd.f32 %v973, %v1005
    %v1017 = vadd.f32 %v978, %v1005
    %v1018 = vadd.f32 %v981, %v1005
    %v1019 = vadd.f32 %v986, %v1005
    %v1020 = vadd.f32 %v989, %v1005
    %v1021 = vadd.f32 %v994, %v1005
    %v1022 = vadd.f32 %v997, %v1005
    %v1023 = vmax.f32 %v1007, 0.0
    %v1024 = vmax.f32 %v1008, 0.0
    %v1025 = vmax.f32 %v1009, 0.0
    %v1026 = vmax.f32 %v1010, 0.0
    %v1027 = vmax.f32 %v1011, 0.0
    %v1028 = vmax.f32 %v1012, 0.0
    %v1029 = vmax.f32 %v1013, 0.0
    %v1030 = vmax.f32 %v1014, 0.0
    %v1031 = vmax.f32 %v1015, 0.0
    %v1032 = vmax.f32 %v1016, 0.0
    %v1033 = vmax.f32 %v1017, 0.0
    %v1034 = vmax.f32 %v1018, 0.0
    %v1035 = vmax.f32 %v1019, 0.0
    %v1036 = vmax.f32 %v1020, 0.0
    %v1037 = vmax.f32 %v1021, 0.0
    %v1038 = vmax.f32 %v1022, 0.0
    %v1039 = vld [vmem:[%s2] sm:$0xff]
    %v1040 = vld [vmem:[%s2 + $0x8] sm:$0xff]
    %v1041 = vld [vmem:[%s2 + $0x10] sm:$0xff]
    %v1042 = vld [vmem:[%s2 + $0x18] sm:$0xff]
    %v1043 = vld [vmem:[%s2 + $0x20] sm:$0xff]
    %v1044 = vld [vmem:[%s2 + $0x28] sm:$0xff]
    %v1045 = vld [vmem:[%s2 + $0x30] sm:$0xff]
    %v1046 = vld [vmem:[%s2 + $0x38] sm:$0xff]
    %v1047 = vld [vmem:[%s2 + $0x40] sm:$0xff]
    %v1048 = vld [vmem:[%s2 + $0x48] sm:$0xff]
    %v1049 = vld [vmem:[%s2 + $0x50] sm:$0xff]
    %v1050 = vld [vmem:[%s2 + $0x58] sm:$0xff]
    %v1051 = vld [vmem:[%s2 + $0x60] sm:$0xff]
    %v1052 = vld [vmem:[%s2 + $0x68] sm:$0xff]
    %v1053 = vld [vmem:[%s2 + $0x70] sm:$0xff]
    %v1054 = vld [vmem:[%s2 + $0x78] sm:$0xff]
    %v1055 = vpack.c.bf16 %v1024, %v1023
    %v1056 = vpack.c.bf16 %v1026, %v1025
    %v1057 = vpack.c.bf16 %v1028, %v1027
    %v1058 = vpack.c.bf16 %v1030, %v1029
    %v1059 = vpack.c.bf16 %v1032, %v1031
    %v1060 = vpack.c.bf16 %v1034, %v1033
    %v1061 = vpack.c.bf16 %v1036, %v1035
    %v1062 = vpack.c.bf16 %v1038, %v1037
    %v1063 = vpack.c.bf16 %v1040, %v1039
    %v1064 = vpack.c.bf16 %v1042, %v1041
    %v1065 = vpack.c.bf16 %v1044, %v1043
    %v1066 = vpack.c.bf16 %v1046, %v1045
    %v1067 = vpack.c.bf16 %v1048, %v1047
    %v1068 = vpack.c.bf16 %v1050, %v1049
    %v1069 = vpack.c.bf16 %v1052, %v1051
    %v1070 = vpack.c.bf16 %v1054, %v1053
    %v1071 = vld [vmem:[%s10] sm:$0xf]
    %v1072 = vld [vmem:[%s10 + $0x4] sm:$0xf]
    %v1073 = vld [vmem:[%s10 + $0x8] sm:$0xf]
    %v1074 = vld [vmem:[%s10 + $0xc] sm:$0xf]
    %v1075 = vld [vmem:[%s10 + $0x10] sm:$0xf]
    %v1076 = vld [vmem:[%s10 + $0x14] sm:$0xf]
    %v1077 = vld [vmem:[%s10 + $0x18] sm:$0xf]
    %v1078 = vld [vmem:[%s10 + $0x1c] sm:$0xf]
    %v1079 = vld [vmem:[%s11] sm:$0x1]
    %v1081 = vlaneseq
    %v1082 = vshrl.u32 %v1081, 7
    %v1083 = vsub.s32 0, %v1082
    %v1084 = vrot.slane %v1079, %v1083
    %v1094 = vunpack.c.l.b16 %v1071
    %v1095 = vunpack.c.l.b16 %v1072
    %v1096 = vunpack.c.l.b16 %v1073
    %v1097 = vunpack.c.l.b16 %v1074
    %v1098 = vunpack.c.l.b16 %v1075
    %v1099 = vunpack.c.l.b16 %v1076
    %v1100 = vunpack.c.l.b16 %v1077
    %v1101 = vunpack.c.l.b16 %v1078
    %v1102 = vpack.c.b16 %v1095, %v1094
    %v1103 = vpack.c.b16 %v1097, %v1096
    %v1104 = vpack.c.b16 %v1099, %v1098
    %v1105 = vpack.c.b16 %v1101, %v1100
    %v1111 = vsel %vm379, %v1055, 0
    %v1114 = vsel %vm379, %v1056, 0
    %v1117 = vsel %vm379, %v1057, 0
    %v1120 = vsel %vm379, %v1058, 0
    %v1123 = vsel %vm379, %v1059, 0
    %v1126 = vsel %vm379, %v1060, 0
    %v1129 = vsel %vm379, %v1061, 0
    %v1132 = vsel %vm379, %v1062, 0
    %v1135 = vsel %vm379, %v1063, 0
    %v1138 = vsel %vm379, %v1064, 0
    %v1141 = vsel %vm379, %v1065, 0
    %v1144 = vsel %vm379, %v1066, 0
    %v1147 = vsel %vm379, %v1067, 0
    %v1150 = vsel %vm379, %v1068, 0
    %v1153 = vsel %vm379, %v1069, 0
    %v1156 = vsel %vm379, %v1070, 0
    %1158 = vmatprep.subr.bf16.mxu0 0
    %1159 = vmatpush1.bf16.msra.mxu0 0
    %1160 = vmatprep.subr.bf16.mxu0 0
    %1161 = vmatpush1.bf16.msra.mxu0 0
    %1162 = vmatprep.subr.bf16.mxu0 0
    %1163 = vmatpush1.bf16.msra.mxu0 0
    %1164 = vmatprep.subr.bf16.mxu0 0
    %1165 = vmatpush1.bf16.msra.mxu0 0
    %1166 = vmatprep.subr.bf16.mxu0 0
    %1167 = vmatpush1.bf16.msra.mxu0 %v1105
    %1168 = vmatprep.subr.bf16.mxu0 0
    %1169 = vmatpush1.bf16.msra.mxu0 %v1104
    %1170 = vmatprep.subr.bf16.mxu0 0
    %1171 = vmatpush1.bf16.msra.mxu0 %v1103
    %1172 = vmatprep.subr.bf16.mxu0 0
    %1173 = vmatpush1.bf16.msra.mxu0 %v1102
    %1174 = vmatprep.subr.bf16.mxu0 0
    %1175 = vmatpush2.bf16.msra.mxu0 0
    %1176 = vmatprep.subr.bf16.mxu0 0
    %1177 = vmatpush2.bf16.msra.mxu0 0
    %1178 = vmatprep.subr.bf16.mxu0 0
    %1179 = vmatpush2.bf16.msra.mxu0 0
    %1180 = vmatprep.subr.bf16.mxu0 0
    %1181 = vmatpush2.bf16.msra.mxu0 0
    %1182 = vmatprep.subr.bf16.mxu0 0
    %1183 = vmatpush2.bf16.msra.mxu0 0
    %1184 = vmatprep.subr.bf16.mxu0 0
    %1185 = vmatpush2.bf16.msra.mxu0 0
    %1186 = vmatprep.subr.bf16.mxu0 0
    %1187 = vmatpush2.bf16.msra.mxu0 0
    %1188 = vmatprep.subr.bf16.mxu0 0
    %1189 = vmatpush2.bf16.msra.mxu0 0
    %1190 = vmatprep.mubr.bf16.mxu0 0
    %1191 = vmatmul.mubr.bf16.gmra.mxu0 %v1111
    %v1192 = vpop.f32.mrf.mxu0
    %v1193 = vadd.f32 %v1084, %v1192
    %v1194 = vpop.f32.mrf.mxu0
    %v1195 = vpop.f32.mrf.mxu0
    %v1196 = vadd.f32 %v1084, %v1195
    %v1197 = vpop.f32.mrf.mxu0
    %1198 = vmatprep.mubr.bf16.mxu0 0
    %1199 = vmatmul.mubr.bf16.gmra.mxu0 %v1114
    %v1200 = vpop.f32.mrf.mxu0
    %v1201 = vadd.f32 %v1084, %v1200
    %v1202 = vpop.f32.mrf.mxu0
    %v1203 = vpop.f32.mrf.mxu0
    %v1204 = vadd.f32 %v1084, %v1203
    %v1205 = vpop.f32.mrf.mxu0
    %1206 = vmatprep.mubr.bf16.mxu0 0
    %1207 = vmatmul.mubr.bf16.gmra.mxu0 %v1117
    %v1208 = vpop.f32.mrf.mxu0
    %v1209 = vadd.f32 %v1084, %v1208
    %v1210 = vpop.f32.mrf.mxu0
    %v1211 = vpop.f32.mrf.mxu0
    %v1212 = vadd.f32 %v1084, %v1211
    %v1213 = vpop.f32.mrf.mxu0
    %1214 = vmatprep.mubr.bf16.mxu0 0
    %1215 = vmatmul.mubr.bf16.gmra.mxu0 %v1120
    %v1216 = vpop.f32.mrf.mxu0
    %v1217 = vadd.f32 %v1084, %v1216
    %v1218 = vpop.f32.mrf.mxu0
    %v1219 = vpop.f32.mrf.mxu0
    %v1220 = vadd.f32 %v1084, %v1219
    %v1221 = vpop.f32.mrf.mxu0
    %1222 = vmatprep.mubr.bf16.mxu0 0
    %1223 = vmatmul.mubr.bf16.gmra.mxu0 %v1123
    %v1224 = vpop.f32.mrf.mxu0
    %v1225 = vadd.f32 %v1084, %v1224
    %v1226 = vpop.f32.mrf.mxu0
    %v1227 = vpop.f32.mrf.mxu0
    %v1228 = vadd.f32 %v1084, %v1227
    %v1229 = vpop.f32.mrf.mxu0
    %1230 = vmatprep.mubr.bf16.mxu0 0
    %1231 = vmatmul.mubr.bf16.gmra.mxu0 %v1126
    %v1232 = vpop.f32.mrf.mxu0
    %v1233 = vadd.f32 %v1084, %v1232
    %v1234 = vpop.f32.mrf.mxu0
    %v1235 = vpop.f32.mrf.mxu0
    %v1236 = vadd.f32 %v1084, %v1235
    %v1237 = vpop.f32.mrf.mxu0
    %1238 = vmatprep.mubr.bf16.mxu0 0
    %1239 = vmatmul.mubr.bf16.gmra.mxu0 %v1129
    %v1240 = vpop.f32.mrf.mxu0
    %v1241 = vadd.f32 %v1084, %v1240
    %v1242 = vpop.f32.mrf.mxu0
    %v1243 = vpop.f32.mrf.mxu0
    %v1244 = vadd.f32 %v1084, %v1243
    %v1245 = vpop.f32.mrf.mxu0
    %1246 = vmatprep.mubr.bf16.mxu0 0
    %1247 = vmatmul.mubr.bf16.gmra.mxu0 %v1132
    %v1248 = vpop.f32.mrf.mxu0
    %v1249 = vadd.f32 %v1084, %v1248
    %v1250 = vpop.f32.mrf.mxu0
    %v1251 = vpop.f32.mrf.mxu0
    %v1252 = vadd.f32 %v1084, %v1251
    %v1253 = vpop.f32.mrf.mxu0
    %1254 = vmatprep.mubr.bf16.mxu0 0
    %1255 = vmatmul.mubr.bf16.gmra.mxu0 %v1135
    %v1256 = vpop.f32.mrf.mxu0
    %v1257 = vadd.f32 %v1084, %v1256
    %v1258 = vpop.f32.mrf.mxu0
    %v1259 = vpop.f32.mrf.mxu0
    %v1260 = vadd.f32 %v1084, %v1259
    %v1261 = vpop.f32.mrf.mxu0
    %1262 = vmatprep.mubr.bf16.mxu0 0
    %1263 = vmatmul.mubr.bf16.gmra.mxu0 %v1138
    %v1264 = vpop.f32.mrf.mxu0
    %v1265 = vadd.f32 %v1084, %v1264
    %v1266 = vpop.f32.mrf.mxu0
    %v1267 = vpop.f32.mrf.mxu0
    %v1268 = vadd.f32 %v1084, %v1267
    %v1269 = vpop.f32.mrf.mxu0
    %1270 = vmatprep.mubr.bf16.mxu0 0
    %1271 = vmatmul.mubr.bf16.gmra.mxu0 %v1141
    %v1272 = vpop.f32.mrf.mxu0
    %v1273 = vadd.f32 %v1084, %v1272
    %v1274 = vpop.f32.mrf.mxu0
    %v1275 = vpop.f32.mrf.mxu0
    %v1276 = vadd.f32 %v1084, %v1275
    %v1277 = vpop.f32.mrf.mxu0
    %1278 = vmatprep.mubr.bf16.mxu0 0
    %1279 = vmatmul.mubr.bf16.gmra.mxu0 %v1144
    %v1280 = vpop.f32.mrf.mxu0
    %v1281 = vadd.f32 %v1084, %v1280
    %v1282 = vpop.f32.mrf.mxu0
    %v1283 = vpop.f32.mrf.mxu0
    %v1284 = vadd.f32 %v1084, %v1283
    %v1285 = vpop.f32.mrf.mxu0
    %1286 = vmatprep.mubr.bf16.mxu0 0
    %1287 = vmatmul.mubr.bf16.gmra.mxu0 %v1147
    %v1288 = vpop.f32.mrf.mxu0
    %v1289 = vadd.f32 %v1084, %v1288
    %v1290 = vpop.f32.mrf.mxu0
    %v1291 = vpop.f32.mrf.mxu0
    %v1292 = vadd.f32 %v1084, %v1291
    %v1293 = vpop.f32.mrf.mxu0
    %1294 = vmatprep.mubr.bf16.mxu0 0
    %1295 = vmatmul.mubr.bf16.gmra.mxu0 %v1150
    %v1296 = vpop.f32.mrf.mxu0
    %v1297 = vadd.f32 %v1084, %v1296
    %v1298 = vpop.f32.mrf.mxu0
    %v1299 = vpop.f32.mrf.mxu0
    %v1300 = vadd.f32 %v1084, %v1299
    %v1301 = vpop.f32.mrf.mxu0
    %1302 = vmatprep.mubr.bf16.mxu0 0
    %1303 = vmatmul.mubr.bf16.gmra.mxu0 %v1153
    %v1304 = vpop.f32.mrf.mxu0
    %v1305 = vadd.f32 %v1084, %v1304
    %v1306 = vpop.f32.mrf.mxu0
    %v1307 = vpop.f32.mrf.mxu0
    %v1308 = vadd.f32 %v1084, %v1307
    %v1309 = vpop.f32.mrf.mxu0
    %1310 = vmatprep.mubr.bf16.mxu0 0
    %1311 = vmatmul.mubr.bf16.gmra.mxu0 %v1156
    %v1312 = vpop.f32.mrf.mxu0
    %v1313 = vadd.f32 %v1084, %v1312
    %v1314 = vpop.f32.mrf.mxu0
    %v1315 = vpop.f32.mrf.mxu0
    %v1316 = vadd.f32 %v1084, %v1315
    %v1317 = vpop.f32.mrf.mxu0
    %1318 = vdwg.mxu0
    %vm1319 = vcmp.gt.f32.partialorder %v1193, 0.0
    %vm1320 = vcmp.gt.f32.partialorder %v1196, 0.0
    %vm1321 = vcmp.gt.f32.partialorder %v1201, 0.0
    %vm1322 = vcmp.gt.f32.partialorder %v1204, 0.0
    %vm1323 = vcmp.gt.f32.partialorder %v1209, 0.0
    %vm1324 = vcmp.gt.f32.partialorder %v1212, 0.0
    %vm1325 = vcmp.gt.f32.partialorder %v1217, 0.0
    %vm1326 = vcmp.gt.f32.partialorder %v1220, 0.0
    %vm1327 = vcmp.gt.f32.partialorder %v1225, 0.0
    %vm1328 = vcmp.gt.f32.partialorder %v1228, 0.0
    %vm1329 = vcmp.gt.f32.partialorder %v1233, 0.0
    %vm1330 = vcmp.gt.f32.partialorder %v1236, 0.0
    %vm1331 = vcmp.gt.f32.partialorder %v1241, 0.0
    %vm1332 = vcmp.gt.f32.partialorder %v1244, 0.0
    %vm1333 = vcmp.gt.f32.partialorder %v1249, 0.0
    %vm1334 = vcmp.gt.f32.partialorder %v1252, 0.0
    %vm1335 = vcmp.gt.f32.partialorder %v1257, 0.0
    %vm1336 = vcmp.gt.f32.partialorder %v1260, 0.0
    %vm1337 = vcmp.gt.f32.partialorder %v1265, 0.0
    %vm1338 = vcmp.gt.f32.partialorder %v1268, 0.0
    %vm1339 = vcmp.gt.f32.partialorder %v1273, 0.0
    %vm1340 = vcmp.gt.f32.partialorder %v1276, 0.0
    %vm1341 = vcmp.gt.f32.partialorder %v1281, 0.0
    %vm1342 = vcmp.gt.f32.partialorder %v1284, 0.0
    %vm1343 = vcmp.gt.f32.partialorder %v1289, 0.0
    %vm1344 = vcmp.gt.f32.partialorder %v1292, 0.0
    %vm1345 = vcmp.gt.f32.partialorder %v1297, 0.0
    %vm1346 = vcmp.gt.f32.partialorder %v1300, 0.0
    %vm1347 = vcmp.gt.f32.partialorder %v1305, 0.0
    %vm1348 = vcmp.gt.f32.partialorder %v1308, 0.0
    %vm1349 = vcmp.gt.f32.partialorder %v1313, 0.0
    %vm1350 = vcmp.gt.f32.partialorder %v1316, 0.0
    %v1351 = vmin.f32 %v1193, 0.0
    %v1352 = vmin.f32 %v1196, 0.0
    %v1353 = vmin.f32 %v1201, 0.0
    %v1354 = vmin.f32 %v1204, 0.0
    %v1355 = vmin.f32 %v1209, 0.0
    %v1356 = vmin.f32 %v1212, 0.0
    %v1357 = vmin.f32 %v1217, 0.0
    %v1358 = vmin.f32 %v1220, 0.0
    %v1359 = vmin.f32 %v1225, 0.0
    %v1360 = vmin.f32 %v1228, 0.0
    %v1361 = vmin.f32 %v1233, 0.0
    %v1362 = vmin.f32 %v1236, 0.0
    %v1363 = vmin.f32 %v1241, 0.0
    %v1364 = vmin.f32 %v1244, 0.0
    %v1365 = vmin.f32 %v1249, 0.0
    %v1366 = vmin.f32 %v1252, 0.0
    %v1367 = vmin.f32 %v1257, 0.0
    %v1368 = vmin.f32 %v1260, 0.0
    %v1369 = vmin.f32 %v1265, 0.0
    %v1370 = vmin.f32 %v1268, 0.0
    %v1371 = vmin.f32 %v1273, 0.0
    %v1372 = vmin.f32 %v1276, 0.0
    %v1373 = vmin.f32 %v1281, 0.0
    %v1374 = vmin.f32 %v1284, 0.0
    %v1375 = vmin.f32 %v1289, 0.0
    %v1376 = vmin.f32 %v1292, 0.0
    %v1377 = vmin.f32 %v1297, 0.0
    %v1378 = vmin.f32 %v1300, 0.0
    %v1379 = vmin.f32 %v1305, 0.0
    %v1380 = vmin.f32 %v1308, 0.0
    %v1381 = vmin.f32 %v1313, 0.0
    %v1382 = vmin.f32 %v1316, 0.0
    %v1383 = vmul.f32 %v1351, 1.442695
    %v1384 = vpow.pop %v1383
    %v1385 = vmul.f32 %v1352, 1.442695
    %v1386 = vpow.pop %v1385
    %v1387 = vmul.f32 %v1353, 1.442695
    %v1388 = vpow.pop %v1387
    %v1389 = vmul.f32 %v1354, 1.442695
    %v1390 = vpow.pop %v1389
    %v1391 = vmul.f32 %v1355, 1.442695
    %v1392 = vpow.pop %v1391
    %v1393 = vmul.f32 %v1356, 1.442695
    %v1394 = vpow.pop %v1393
    %v1395 = vmul.f32 %v1357, 1.442695
    %v1396 = vpow.pop %v1395
    %v1397 = vmul.f32 %v1358, 1.442695
    %v1398 = vpow.pop %v1397
    %v1399 = vmul.f32 %v1359, 1.442695
    %v1400 = vpow.pop %v1399
    %v1401 = vmul.f32 %v1360, 1.442695
    %v1402 = vpow.pop %v1401
    %v1403 = vmul.f32 %v1361, 1.442695
    %v1404 = vpow.pop %v1403
    %v1405 = vmul.f32 %v1362, 1.442695
    %v1406 = vpow.pop %v1405
    %v1407 = vmul.f32 %v1363, 1.442695
    %v1408 = vpow.pop %v1407
    %v1409 = vmul.f32 %v1364, 1.442695
    %v1410 = vpow.pop %v1409
    %v1411 = vmul.f32 %v1365, 1.442695
    %v1412 = vpow.pop %v1411
    %v1413 = vmul.f32 %v1366, 1.442695
    %v1414 = vpow.pop %v1413
    %v1415 = vmul.f32 %v1367, 1.442695
    %v1416 = vpow.pop %v1415
    %v1417 = vmul.f32 %v1368, 1.442695
    %v1418 = vpow.pop %v1417
    %v1419 = vmul.f32 %v1369, 1.442695
    %v1420 = vpow.pop %v1419
    %v1421 = vmul.f32 %v1370, 1.442695
    %v1422 = vpow.pop %v1421
    %v1423 = vmul.f32 %v1371, 1.442695
    %v1424 = vpow.pop %v1423
    %v1425 = vmul.f32 %v1372, 1.442695
    %v1426 = vpow.pop %v1425
    %v1427 = vmul.f32 %v1373, 1.442695
    %v1428 = vpow.pop %v1427
    %v1429 = vmul.f32 %v1374, 1.442695
    %v1430 = vpow.pop %v1429
    %v1431 = vmul.f32 %v1375, 1.442695
    %v1432 = vpow.pop %v1431
    %v1433 = vmul.f32 %v1376, 1.442695
    %v1434 = vpow.pop %v1433
    %v1435 = vmul.f32 %v1377, 1.442695
    %v1436 = vpow.pop %v1435
    %v1437 = vmul.f32 %v1378, 1.442695
    %v1438 = vpow.pop %v1437
    %v1439 = vmul.f32 %v1379, 1.442695
    %v1440 = vpow.pop %v1439
    %v1441 = vmul.f32 %v1380, 1.442695
    %v1442 = vpow.pop %v1441
    %v1443 = vmul.f32 %v1381, 1.442695
    %v1444 = vpow.pop %v1443
    %v1445 = vmul.f32 %v1382, 1.442695
    %v1446 = vpow.pop %v1445
    %v1447 = vsub.f32 %v1384, 1.0
    %v1448 = vsub.f32 %v1386, 1.0
    %v1449 = vsub.f32 %v1388, 1.0
    %v1450 = vsub.f32 %v1390, 1.0
    %v1451 = vsub.f32 %v1392, 1.0
    %v1452 = vsub.f32 %v1394, 1.0
    %v1453 = vsub.f32 %v1396, 1.0
    %v1454 = vsub.f32 %v1398, 1.0
    %v1455 = vsub.f32 %v1400, 1.0
    %v1456 = vsub.f32 %v1402, 1.0
    %v1457 = vsub.f32 %v1404, 1.0
    %v1458 = vsub.f32 %v1406, 1.0
    %v1459 = vsub.f32 %v1408, 1.0
    %v1460 = vsub.f32 %v1410, 1.0
    %v1461 = vsub.f32 %v1412, 1.0
    %v1462 = vsub.f32 %v1414, 1.0
    %v1463 = vsub.f32 %v1416, 1.0
    %v1464 = vsub.f32 %v1418, 1.0
    %v1465 = vsub.f32 %v1420, 1.0
    %v1466 = vsub.f32 %v1422, 1.0
    %v1467 = vsub.f32 %v1424, 1.0
    %v1468 = vsub.f32 %v1426, 1.0
    %v1469 = vsub.f32 %v1428, 1.0
    %v1470 = vsub.f32 %v1430, 1.0
    %v1471 = vsub.f32 %v1432, 1.0
    %v1472 = vsub.f32 %v1434, 1.0
    %v1473 = vsub.f32 %v1436, 1.0
    %v1474 = vsub.f32 %v1438, 1.0
    %v1475 = vsub.f32 %v1440, 1.0
    %v1476 = vsub.f32 %v1442, 1.0
    %v1477 = vsub.f32 %v1444, 1.0
    %v1478 = vsub.f32 %v1446, 1.0
    %v1479 = vsel %vm1319, %v1193, %v1447
    %v1480 = vsel %vm1320, %v1196, %v1448
    %v1481 = vsel %vm1321, %v1201, %v1449
    %v1482 = vsel %vm1322, %v1204, %v1450
    %v1483 = vsel %vm1323, %v1209, %v1451
    %v1484 = vsel %vm1324, %v1212, %v1452
    %v1485 = vsel %vm1325, %v1217, %v1453
    %v1486 = vsel %vm1326, %v1220, %v1454
    %v1487 = vsel %vm1327, %v1225, %v1455
    %v1488 = vsel %vm1328, %v1228, %v1456
    %v1489 = vsel %vm1329, %v1233, %v1457
    %v1490 = vsel %vm1330, %v1236, %v1458
    %v1491 = vsel %vm1331, %v1241, %v1459
    %v1492 = vsel %vm1332, %v1244, %v1460
    %v1493 = vsel %vm1333, %v1249, %v1461
    %v1494 = vsel %vm1334, %v1252, %v1462
    %v1495 = vsel %vm1335, %v1257, %v1463
    %v1496 = vsel %vm1336, %v1260, %v1464
    %v1497 = vsel %vm1337, %v1265, %v1465
    %v1498 = vsel %vm1338, %v1268, %v1466
    %v1499 = vsel %vm1339, %v1273, %v1467
    %v1500 = vsel %vm1340, %v1276, %v1468
    %v1501 = vsel %vm1341, %v1281, %v1469
    %v1502 = vsel %vm1342, %v1284, %v1470
    %v1503 = vsel %vm1343, %v1289, %v1471
    %v1504 = vsel %vm1344, %v1292, %v1472
    %v1505 = vsel %vm1345, %v1297, %v1473
    %v1506 = vsel %vm1346, %v1300, %v1474
    %v1507 = vsel %vm1347, %v1305, %v1475
    %v1508 = vsel %vm1348, %v1308, %v1476
    %v1509 = vsel %vm1349, %v1313, %v1477
    %v1510 = vsel %vm1350, %v1316, %v1478
    %v1511 = vmul.f32 %v1479, %v1479
    %v1512 = vmul.f32 %v1480, %v1480
    %v1513 = vmul.f32 %v1481, %v1481
    %v1514 = vmul.f32 %v1482, %v1482
    %v1515 = vmul.f32 %v1483, %v1483
    %v1516 = vmul.f32 %v1484, %v1484
    %v1517 = vmul.f32 %v1485, %v1485
    %v1518 = vmul.f32 %v1486, %v1486
    %v1519 = vmul.f32 %v1487, %v1487
    %v1520 = vmul.f32 %v1488, %v1488
    %v1521 = vmul.f32 %v1489, %v1489
    %v1522 = vmul.f32 %v1490, %v1490
    %v1523 = vmul.f32 %v1491, %v1491
    %v1524 = vmul.f32 %v1492, %v1492
    %v1525 = vmul.f32 %v1493, %v1493
    %v1526 = vmul.f32 %v1494, %v1494
    %v1527 = vmul.f32 %v1495, %v1495
    %v1528 = vmul.f32 %v1496, %v1496
    %v1529 = vmul.f32 %v1497, %v1497
    %v1530 = vmul.f32 %v1498, %v1498
    %v1531 = vmul.f32 %v1499, %v1499
    %v1532 = vmul.f32 %v1500, %v1500
    %v1533 = vmul.f32 %v1501, %v1501
    %v1534 = vmul.f32 %v1502, %v1502
    %v1535 = vmul.f32 %v1503, %v1503
    %v1536 = vmul.f32 %v1504, %v1504
    %v1537 = vmul.f32 %v1505, %v1505
    %v1538 = vmul.f32 %v1506, %v1506
    %v1539 = vmul.f32 %v1507, %v1507
    %v1540 = vmul.f32 %v1508, %v1508
    %v1541 = vmul.f32 %v1509, %v1509
    %v1542 = vmul.f32 %v1510, %v1510
    %1543 = vadd.xlane.f32.xlu0 %v1511
    %v1544 = vpop.xlane.xlu0 %1543
    %1545 = vadd.xlane.f32.xlu0 %v1512
    %v1546 = vpop.xlane.xlu0 %1545
    %1547 = vadd.xlane.f32.xlu0 %v1513
    %v1548 = vpop.xlane.xlu0 %1547
    %1549 = vadd.xlane.f32.xlu0 %v1514
    %v1550 = vpop.xlane.xlu0 %1549
    %1551 = vadd.xlane.f32.xlu0 %v1515
    %v1552 = vpop.xlane.xlu0 %1551
    %1553 = vadd.xlane.f32.xlu0 %v1516
    %v1554 = vpop.xlane.xlu0 %1553
    %1555 = vadd.xlane.f32.xlu0 %v1517
    %v1556 = vpop.xlane.xlu0 %1555
    %1557 = vadd.xlane.f32.xlu0 %v1518
    %v1558 = vpop.xlane.xlu0 %1557
    %1559 = vadd.xlane.f32.xlu0 %v1519
    %v1560 = vpop.xlane.xlu0 %1559
    %1561 = vadd.xlane.f32.xlu0 %v1520
    %v1562 = vpop.xlane.xlu0 %1561
    %1563 = vadd.xlane.f32.xlu0 %v1521
    %v1564 = vpop.xlane.xlu0 %1563
    %1565 = vadd.xlane.f32.xlu0 %v1522
    %v1566 = vpop.xlane.xlu0 %1565
    %1567 = vadd.xlane.f32.xlu0 %v1523
    %v1568 = vpop.xlane.xlu0 %1567
    %1569 = vadd.xlane.f32.xlu0 %v1524
    %v1570 = vpop.xlane.xlu0 %1569
    %1571 = vadd.xlane.f32.xlu0 %v1525
    %v1572 = vpop.xlane.xlu0 %1571
    %1573 = vadd.xlane.f32.xlu0 %v1526
    %v1574 = vpop.xlane.xlu0 %1573
    %1575 = vadd.xlane.f32.xlu0 %v1527
    %v1576 = vpop.xlane.xlu0 %1575
    %1577 = vadd.xlane.f32.xlu0 %v1528
    %v1578 = vpop.xlane.xlu0 %1577
    %1579 = vadd.xlane.f32.xlu0 %v1529
    %v1580 = vpop.xlane.xlu0 %1579
    %1581 = vadd.xlane.f32.xlu0 %v1530
    %v1582 = vpop.xlane.xlu0 %1581
    %1583 = vadd.xlane.f32.xlu0 %v1531
    %v1584 = vpop.xlane.xlu0 %1583
    %1585 = vadd.xlane.f32.xlu0 %v1532
    %v1586 = vpop.xlane.xlu0 %1585
    %1587 = vadd.xlane.f32.xlu0 %v1533
    %v1588 = vpop.xlane.xlu0 %1587
    %1589 = vadd.xlane.f32.xlu0 %v1534
    %v1590 = vpop.xlane.xlu0 %1589
    %1591 = vadd.xlane.f32.xlu0 %v1535
    %v1592 = vpop.xlane.xlu0 %1591
    %1593 = vadd.xlane.f32.xlu0 %v1536
    %v1594 = vpop.xlane.xlu0 %1593
    %1595 = vadd.xlane.f32.xlu0 %v1537
    %v1596 = vpop.xlane.xlu0 %1595
    %1597 = vadd.xlane.f32.xlu0 %v1538
    %v1598 = vpop.xlane.xlu0 %1597
    %1599 = vadd.xlane.f32.xlu0 %v1539
    %v1600 = vpop.xlane.xlu0 %1599
    %1601 = vadd.xlane.f32.xlu0 %v1540
    %v1602 = vpop.xlane.xlu0 %1601
    %1603 = vadd.xlane.f32.xlu0 %v1541
    %v1604 = vpop.xlane.xlu0 %1603
    %1605 = vadd.xlane.f32.xlu0 %v1542
    %v1606 = vpop.xlane.xlu0 %1605
    %v1607 = vmax.f32 %v1544, 1e-24
    %v1608 = vmax.f32 %v1546, 1e-24
    %v1609 = vmax.f32 %v1548, 1e-24
    %v1610 = vmax.f32 %v1550, 1e-24
    %v1611 = vmax.f32 %v1552, 1e-24
    %v1612 = vmax.f32 %v1554, 1e-24
    %v1613 = vmax.f32 %v1556, 1e-24
    %v1614 = vmax.f32 %v1558, 1e-24
    %v1615 = vmax.f32 %v1560, 1e-24
    %v1616 = vmax.f32 %v1562, 1e-24
    %v1617 = vmax.f32 %v1564, 1e-24
    %v1618 = vmax.f32 %v1566, 1e-24
    %v1619 = vmax.f32 %v1568, 1e-24
    %v1620 = vmax.f32 %v1570, 1e-24
    %v1621 = vmax.f32 %v1572, 1e-24
    %v1622 = vmax.f32 %v1574, 1e-24
    %v1623 = vmax.f32 %v1576, 1e-24
    %v1624 = vmax.f32 %v1578, 1e-24
    %v1625 = vmax.f32 %v1580, 1e-24
    %v1626 = vmax.f32 %v1582, 1e-24
    %v1627 = vmax.f32 %v1584, 1e-24
    %v1628 = vmax.f32 %v1586, 1e-24
    %v1629 = vmax.f32 %v1588, 1e-24
    %v1630 = vmax.f32 %v1590, 1e-24
    %v1631 = vmax.f32 %v1592, 1e-24
    %v1632 = vmax.f32 %v1594, 1e-24
    %v1633 = vmax.f32 %v1596, 1e-24
    %v1634 = vmax.f32 %v1598, 1e-24
    %v1635 = vmax.f32 %v1600, 1e-24
    %v1636 = vmax.f32 %v1602, 1e-24
    %v1637 = vmax.f32 %v1604, 1e-24
    %v1638 = vmax.f32 %v1606, 1e-24
    %v1639 = vrsqrt.pop %v1607
    %v1640 = vrsqrt.pop %v1608
    %v1641 = vrsqrt.pop %v1609
    %v1642 = vrsqrt.pop %v1610
    %v1643 = vrsqrt.pop %v1611
    %v1644 = vrsqrt.pop %v1612
    %v1645 = vrsqrt.pop %v1613
    %v1646 = vrsqrt.pop %v1614
    %v1647 = vrsqrt.pop %v1615
    %v1648 = vrsqrt.pop %v1616
    %v1649 = vrsqrt.pop %v1617
    %v1650 = vrsqrt.pop %v1618
    %v1651 = vrsqrt.pop %v1619
    %v1652 = vrsqrt.pop %v1620
    %v1653 = vrsqrt.pop %v1621
    %v1654 = vrsqrt.pop %v1622
    %v1655 = vrsqrt.pop %v1623
    %v1656 = vrsqrt.pop %v1624
    %v1657 = vrsqrt.pop %v1625
    %v1658 = vrsqrt.pop %v1626
    %v1659 = vrsqrt.pop %v1627
    %v1660 = vrsqrt.pop %v1628
    %v1661 = vrsqrt.pop %v1629
    %v1662 = vrsqrt.pop %v1630
    %v1663 = vrsqrt.pop %v1631
    %v1664 = vrsqrt.pop %v1632
    %v1665 = vrsqrt.pop %v1633
    %v1666 = vrsqrt.pop %v1634
    %v1667 = vrsqrt.pop %v1635
    %v1668 = vrsqrt.pop %v1636
    %v1669 = vrsqrt.pop %v1637
    %v1670 = vrsqrt.pop %v1638
    %v1671 = vmul.f32 %v1479, %v1639
    %v1672 = vmul.f32 %v1480, %v1640
    %v1673 = vmul.f32 %v1481, %v1641
    %v1674 = vmul.f32 %v1482, %v1642
    %v1675 = vmul.f32 %v1483, %v1643
    %v1676 = vmul.f32 %v1484, %v1644
    %v1677 = vmul.f32 %v1485, %v1645
    %v1678 = vmul.f32 %v1486, %v1646
    %v1679 = vmul.f32 %v1487, %v1647
    %v1680 = vmul.f32 %v1488, %v1648
    %v1681 = vmul.f32 %v1489, %v1649
    %v1682 = vmul.f32 %v1490, %v1650
    %v1683 = vmul.f32 %v1491, %v1651
    %v1684 = vmul.f32 %v1492, %v1652
    %v1685 = vmul.f32 %v1493, %v1653
    %v1686 = vmul.f32 %v1494, %v1654
    %v1687 = vmul.f32 %v1495, %v1655
    %v1688 = vmul.f32 %v1496, %v1656
    %v1689 = vmul.f32 %v1497, %v1657
    %v1690 = vmul.f32 %v1498, %v1658
    %v1691 = vmul.f32 %v1499, %v1659
    %v1692 = vmul.f32 %v1500, %v1660
    %v1693 = vmul.f32 %v1501, %v1661
    %v1694 = vmul.f32 %v1502, %v1662
    %v1695 = vmul.f32 %v1503, %v1663
    %v1696 = vmul.f32 %v1504, %v1664
    %v1697 = vmul.f32 %v1505, %v1665
    %v1698 = vmul.f32 %v1506, %v1666
    %v1699 = vmul.f32 %v1507, %v1667
    %v1700 = vmul.f32 %v1508, %v1668
    %v1701 = vmul.f32 %v1509, %v1669
    %v1702 = vmul.f32 %v1510, %v1670
    %v1703 = vpack.c.bf16 %v1672, %v1671
    %v1704 = vpack.c.bf16 %v1674, %v1673
    %v1705 = vpack.c.bf16 %v1676, %v1675
    %v1706 = vpack.c.bf16 %v1678, %v1677
    %v1707 = vpack.c.bf16 %v1680, %v1679
    %v1708 = vpack.c.bf16 %v1682, %v1681
    %v1709 = vpack.c.bf16 %v1684, %v1683
    %v1710 = vpack.c.bf16 %v1686, %v1685
    %v1711 = vpack.c.bf16 %v1688, %v1687
    %v1712 = vpack.c.bf16 %v1690, %v1689
    %v1713 = vpack.c.bf16 %v1692, %v1691
    %v1714 = vpack.c.bf16 %v1694, %v1693
    %v1715 = vpack.c.bf16 %v1696, %v1695
    %v1716 = vpack.c.bf16 %v1698, %v1697
    %v1717 = vpack.c.bf16 %v1700, %v1699
    %v1718 = vpack.c.bf16 %v1702, %v1701
    %1719 = vmatprep.subr.bf16.mxu0 0
    %1720 = vmatpush1.bf16.xpose.msra.mxu0 %v1710
    %1721 = vmatprep.subr.bf16.mxu0 0
    %1722 = vmatpush1.bf16.xpose.msra.mxu0 %v1709
    %1723 = vmatprep.subr.bf16.mxu0 0
    %1724 = vmatpush1.bf16.xpose.msra.mxu0 %v1708
    %1725 = vmatprep.subr.bf16.mxu0 0
    %1726 = vmatpush1.bf16.xpose.msra.mxu0 %v1707
    %1727 = vmatprep.subr.bf16.mxu0 0
    %1728 = vmatpush1.bf16.xpose.msra.mxu0 %v1706
    %1729 = vmatprep.subr.bf16.mxu0 0
    %1730 = vmatpush1.bf16.xpose.msra.mxu0 %v1705
    %1731 = vmatprep.subr.bf16.mxu0 0
    %1732 = vmatpush1.bf16.xpose.msra.mxu0 %v1704
    %1733 = vmatprep.subr.bf16.mxu0 0
    %1734 = vmatpush1.bf16.xpose.msra.mxu0 %v1703
    %1735 = vmatprep.subr.bf16.mxu0 0
    %1736 = vmatpush2.bf16.xpose.msra.mxu0 %v1718
    %1737 = vmatprep.subr.bf16.mxu0 0
    %1738 = vmatpush2.bf16.xpose.msra.mxu0 %v1717
    %1739 = vmatprep.subr.bf16.mxu0 0
    %1740 = vmatpush2.bf16.xpose.msra.mxu0 %v1716
    %1741 = vmatprep.subr.bf16.mxu0 0
    %1742 = vmatpush2.bf16.xpose.msra.mxu0 %v1715
    %1743 = vmatprep.subr.bf16.mxu0 0
    %1744 = vmatpush2.bf16.xpose.msra.mxu0 %v1714
    %1745 = vmatprep.subr.bf16.mxu0 0
    %1746 = vmatpush2.bf16.xpose.msra.mxu0 %v1713
    %1747 = vmatprep.subr.bf16.mxu0 0
    %1748 = vmatpush2.bf16.xpose.msra.mxu0 %v1712
    %1749 = vmatprep.subr.bf16.mxu0 0
    %1750 = vmatpush2.bf16.xpose.msra.mxu0 %v1711
    %1751 = vmatprep.mubr.bf16.mxu0 0
    %1752 = vmatmul.mubr.bf16.gmra.mxu0 %v1703
    %v1753 = vpop.f32.mrf.mxu0
    %v1754 = vadd.f32 0.0, %v1753
    %v1755 = vpop.f32.mrf.mxu0
    %v1756 = vadd.f32 0.0, %v1755
    %v1757 = vpop.f32.mrf.mxu0
    %v1758 = vadd.f32 0.0, %v1757
    %v1759 = vpop.f32.mrf.mxu0
    %v1760 = vadd.f32 0.0, %v1759
    %1761 = vmatprep.mubr.bf16.mxu0 0
    %1762 = vmatmul.mubr.bf16.gmra.mxu0 %v1704
    %v1763 = vpop.f32.mrf.mxu0
    %v1764 = vadd.f32 0.0, %v1763
    %v1765 = vpop.f32.mrf.mxu0
    %v1766 = vadd.f32 0.0, %v1765
    %v1767 = vpop.f32.mrf.mxu0
    %v1768 = vadd.f32 0.0, %v1767
    %v1769 = vpop.f32.mrf.mxu0
    %v1770 = vadd.f32 0.0, %v1769
    %1771 = vmatprep.mubr.bf16.mxu0 0
    %1772 = vmatmul.mubr.bf16.gmra.mxu0 %v1705
    %v1773 = vpop.f32.mrf.mxu0
    %v1774 = vadd.f32 0.0, %v1773
    %v1775 = vpop.f32.mrf.mxu0
    %v1776 = vadd.f32 0.0, %v1775
    %v1777 = vpop.f32.mrf.mxu0
    %v1778 = vadd.f32 0.0, %v1777
    %v1779 = vpop.f32.mrf.mxu0
    %v1780 = vadd.f32 0.0, %v1779
    %1781 = vmatprep.mubr.bf16.mxu0 0
    %1782 = vmatmul.mubr.bf16.gmra.mxu0 %v1706
    %v1783 = vpop.f32.mrf.mxu0
    %v1784 = vadd.f32 0.0, %v1783
    %v1785 = vpop.f32.mrf.mxu0
    %v1786 = vadd.f32 0.0, %v1785
    %v1787 = vpop.f32.mrf.mxu0
    %v1788 = vadd.f32 0.0, %v1787
    %v1789 = vpop.f32.mrf.mxu0
    %v1790 = vadd.f32 0.0, %v1789
    %1791 = vmatprep.mubr.bf16.mxu0 0
    %1792 = vmatmul.mubr.bf16.gmra.mxu0 %v1707
    %v1793 = vpop.f32.mrf.mxu0
    %v1794 = vadd.f32 0.0, %v1793
    %v1795 = vpop.f32.mrf.mxu0
    %v1796 = vadd.f32 0.0, %v1795
    %v1797 = vpop.f32.mrf.mxu0
    %v1798 = vadd.f32 0.0, %v1797
    %v1799 = vpop.f32.mrf.mxu0
    %v1800 = vadd.f32 0.0, %v1799
    %1801 = vmatprep.mubr.bf16.mxu0 0
    %1802 = vmatmul.mubr.bf16.gmra.mxu0 %v1708
    %v1803 = vpop.f32.mrf.mxu0
    %v1804 = vadd.f32 0.0, %v1803
    %v1805 = vpop.f32.mrf.mxu0
    %v1806 = vadd.f32 0.0, %v1805
    %v1807 = vpop.f32.mrf.mxu0
    %v1808 = vadd.f32 0.0, %v1807
    %v1809 = vpop.f32.mrf.mxu0
    %v1810 = vadd.f32 0.0, %v1809
    %1811 = vmatprep.mubr.bf16.mxu0 0
    %1812 = vmatmul.mubr.bf16.gmra.mxu0 %v1709
    %v1813 = vpop.f32.mrf.mxu0
    %v1814 = vadd.f32 0.0, %v1813
    %v1815 = vpop.f32.mrf.mxu0
    %v1816 = vadd.f32 0.0, %v1815
    %v1817 = vpop.f32.mrf.mxu0
    %v1818 = vadd.f32 0.0, %v1817
    %v1819 = vpop.f32.mrf.mxu0
    %v1820 = vadd.f32 0.0, %v1819
    %1821 = vmatprep.mubr.bf16.mxu0 0
    %1822 = vmatmul.mubr.bf16.gmra.mxu0 %v1710
    %v1823 = vpop.f32.mrf.mxu0
    %v1824 = vadd.f32 0.0, %v1823
    %v1825 = vpop.f32.mrf.mxu0
    %v1826 = vadd.f32 0.0, %v1825
    %v1827 = vpop.f32.mrf.mxu0
    %v1828 = vadd.f32 0.0, %v1827
    %v1829 = vpop.f32.mrf.mxu0
    %v1830 = vadd.f32 0.0, %v1829
    %1831 = vmatprep.mubr.bf16.mxu0 0
    %1832 = vmatmul.mubr.bf16.gmra.mxu0 %v1711
    %v1833 = vpop.f32.mrf.mxu0
    %v1834 = vadd.f32 0.0, %v1833
    %v1835 = vpop.f32.mrf.mxu0
    %v1836 = vadd.f32 0.0, %v1835
    %v1837 = vpop.f32.mrf.mxu0
    %v1838 = vadd.f32 0.0, %v1837
    %v1839 = vpop.f32.mrf.mxu0
    %v1840 = vadd.f32 0.0, %v1839
    %1841 = vmatprep.mubr.bf16.mxu0 0
    %1842 = vmatmul.mubr.bf16.gmra.mxu0 %v1712
    %v1843 = vpop.f32.mrf.mxu0
    %v1844 = vadd.f32 0.0, %v1843
    %v1845 = vpop.f32.mrf.mxu0
    %v1846 = vadd.f32 0.0, %v1845
    %v1847 = vpop.f32.mrf.mxu0
    %v1848 = vadd.f32 0.0, %v1847
    %v1849 = vpop.f32.mrf.mxu0
    %v1850 = vadd.f32 0.0, %v1849
    %1851 = vmatprep.mubr.bf16.mxu0 0
    %1852 = vmatmul.mubr.bf16.gmra.mxu0 %v1713
    %v1853 = vpop.f32.mrf.mxu0
    %v1854 = vadd.f32 0.0, %v1853
    %v1855 = vpop.f32.mrf.mxu0
    %v1856 = vadd.f32 0.0, %v1855
    %v1857 = vpop.f32.mrf.mxu0
    %v1858 = vadd.f32 0.0, %v1857
    %v1859 = vpop.f32.mrf.mxu0
    %v1860 = vadd.f32 0.0, %v1859
    %1861 = vmatprep.mubr.bf16.mxu0 0
    %1862 = vmatmul.mubr.bf16.gmra.mxu0 %v1714
    %v1863 = vpop.f32.mrf.mxu0
    %v1864 = vadd.f32 0.0, %v1863
    %v1865 = vpop.f32.mrf.mxu0
    %v1866 = vadd.f32 0.0, %v1865
    %v1867 = vpop.f32.mrf.mxu0
    %v1868 = vadd.f32 0.0, %v1867
    %v1869 = vpop.f32.mrf.mxu0
    %v1870 = vadd.f32 0.0, %v1869
    %1871 = vmatprep.mubr.bf16.mxu0 0
    %1872 = vmatmul.mubr.bf16.gmra.mxu0 %v1715
    %v1873 = vpop.f32.mrf.mxu0
    %v1874 = vadd.f32 0.0, %v1873
    %v1875 = vpop.f32.mrf.mxu0
    %v1876 = vadd.f32 0.0, %v1875
    %v1877 = vpop.f32.mrf.mxu0
    %v1878 = vadd.f32 0.0, %v1877
    %v1879 = vpop.f32.mrf.mxu0
    %v1880 = vadd.f32 0.0, %v1879
    %1881 = vmatprep.mubr.bf16.mxu0 0
    %1882 = vmatmul.mubr.bf16.gmra.mxu0 %v1716
    %v1883 = vpop.f32.mrf.mxu0
    %v1884 = vadd.f32 0.0, %v1883
    %v1885 = vpop.f32.mrf.mxu0
    %v1886 = vadd.f32 0.0, %v1885
    %v1887 = vpop.f32.mrf.mxu0
    %v1888 = vadd.f32 0.0, %v1887
    %v1889 = vpop.f32.mrf.mxu0
    %v1890 = vadd.f32 0.0, %v1889
    %1891 = vmatprep.mubr.bf16.mxu0 0
    %1892 = vmatmul.mubr.bf16.gmra.mxu0 %v1717
    %v1893 = vpop.f32.mrf.mxu0
    %v1894 = vadd.f32 0.0, %v1893
    %v1895 = vpop.f32.mrf.mxu0
    %v1896 = vadd.f32 0.0, %v1895
    %v1897 = vpop.f32.mrf.mxu0
    %v1898 = vadd.f32 0.0, %v1897
    %v1899 = vpop.f32.mrf.mxu0
    %v1900 = vadd.f32 0.0, %v1899
    %1901 = vmatprep.mubr.bf16.mxu0 0
    %1902 = vmatmul.mubr.bf16.gmra.mxu0 %v1718
    %v1903 = vpop.f32.mrf.mxu0
    %v1904 = vadd.f32 0.0, %v1903
    %v1905 = vpop.f32.mrf.mxu0
    %v1906 = vadd.f32 0.0, %v1905
    %v1907 = vpop.f32.mrf.mxu0
    %v1908 = vadd.f32 0.0, %v1907
    %v1909 = vpop.f32.mrf.mxu0
    %v1910 = vadd.f32 0.0, %v1909
    %1911 = vdwg.mxu0
    %v1912 = vmul.f32 %v1754, 2.0
    %v1913 = vmul.f32 %v1756, 2.0
    %v1914 = vmul.f32 %v1758, 2.0
    %v1915 = vmul.f32 %v1760, 2.0
    %v1916 = vmul.f32 %v1764, 2.0
    %v1917 = vmul.f32 %v1766, 2.0
    %v1918 = vmul.f32 %v1768, 2.0
    %v1919 = vmul.f32 %v1770, 2.0
    %v1920 = vmul.f32 %v1774, 2.0
    %v1921 = vmul.f32 %v1776, 2.0
    %v1922 = vmul.f32 %v1778, 2.0
    %v1923 = vmul.f32 %v1780, 2.0
    %v1924 = vmul.f32 %v1784, 2.0
    %v1925 = vmul.f32 %v1786, 2.0
    %v1926 = vmul.f32 %v1788, 2.0
    %v1927 = vmul.f32 %v1790, 2.0
    %v1928 = vmul.f32 %v1794, 2.0
    %v1929 = vmul.f32 %v1796, 2.0
    %v1930 = vmul.f32 %v1798, 2.0
    %v1931 = vmul.f32 %v1800, 2.0
    %v1932 = vmul.f32 %v1804, 2.0
    %v1933 = vmul.f32 %v1806, 2.0
    %v1934 = vmul.f32 %v1808, 2.0
    %v1935 = vmul.f32 %v1810, 2.0
    %v1936 = vmul.f32 %v1814, 2.0
    %v1937 = vmul.f32 %v1816, 2.0
    %v1938 = vmul.f32 %v1818, 2.0
    %v1939 = vmul.f32 %v1820, 2.0
    %v1940 = vmul.f32 %v1824, 2.0
    %v1941 = vmul.f32 %v1826, 2.0
    %v1942 = vmul.f32 %v1828, 2.0
    %v1943 = vmul.f32 %v1830, 2.0
    %v1944 = vmul.f32 %v1834, 2.0
    %v1945 = vmul.f32 %v1836, 2.0
    %v1946 = vmul.f32 %v1838, 2.0
    %v1947 = vmul.f32 %v1840, 2.0
    %v1948 = vmul.f32 %v1844, 2.0
    %v1949 = vmul.f32 %v1846, 2.0
    %v1950 = vmul.f32 %v1848, 2.0
    %v1951 = vmul.f32 %v1850, 2.0
    %v1952 = vmul.f32 %v1854, 2.0
    %v1953 = vmul.f32 %v1856, 2.0
    %v1954 = vmul.f32 %v1858, 2.0
    %v1955 = vmul.f32 %v1860, 2.0
    %v1956 = vmul.f32 %v1864, 2.0
    %v1957 = vmul.f32 %v1866, 2.0
    %v1958 = vmul.f32 %v1868, 2.0
    %v1959 = vmul.f32 %v1870, 2.0
    %v1960 = vmul.f32 %v1874, 2.0
    %v1961 = vmul.f32 %v1876, 2.0
    %v1962 = vmul.f32 %v1878, 2.0
    %v1963 = vmul.f32 %v1880, 2.0
    %v1964 = vmul.f32 %v1884, 2.0
    %v1965 = vmul.f32 %v1886, 2.0
    %v1966 = vmul.f32 %v1888, 2.0
    %v1967 = vmul.f32 %v1890, 2.0
    %v1968 = vmul.f32 %v1894, 2.0
    %v1969 = vmul.f32 %v1896, 2.0
    %v1970 = vmul.f32 %v1898, 2.0
    %v1971 = vmul.f32 %v1900, 2.0
    %v1972 = vmul.f32 %v1904, 2.0
    %v1973 = vmul.f32 %v1906, 2.0
    %v1974 = vmul.f32 %v1908, 2.0
    %v1975 = vmul.f32 %v1910, 2.0
    %v1976 = vmul.f32 %v1912, 1.442695
    %v1977 = vpow.pop %v1976
    %v1978 = vmul.f32 %v1913, 1.442695
    %v1979 = vpow.pop %v1978
    %v1980 = vmul.f32 %v1914, 1.442695
    %v1981 = vpow.pop %v1980
    %v1982 = vmul.f32 %v1915, 1.442695
    %v1983 = vpow.pop %v1982
    %v1984 = vmul.f32 %v1916, 1.442695
    %v1985 = vpow.pop %v1984
    %v1986 = vmul.f32 %v1917, 1.442695
    %v1987 = vpow.pop %v1986
    %v1988 = vmul.f32 %v1918, 1.442695
    %v1989 = vpow.pop %v1988
    %v1990 = vmul.f32 %v1919, 1.442695
    %v1991 = vpow.pop %v1990
    %v1992 = vmul.f32 %v1920, 1.442695
    %v1993 = vpow.pop %v1992
    %v1994 = vmul.f32 %v1921, 1.442695
    %v1995 = vpow.pop %v1994
    %v1996 = vmul.f32 %v1922, 1.442695
    %v1997 = vpow.pop %v1996
    %v1998 = vmul.f32 %v1923, 1.442695
    %v1999 = vpow.pop %v1998
    %v2000 = vmul.f32 %v1924, 1.442695
    %v2001 = vpow.pop %v2000
    %v2002 = vmul.f32 %v1925, 1.442695
    %v2003 = vpow.pop %v2002
    %v2004 = vmul.f32 %v1926, 1.442695
    %v2005 = vpow.pop %v2004
    %v2006 = vmul.f32 %v1927, 1.442695
    %v2007 = vpow.pop %v2006
    %v2008 = vmul.f32 %v1928, 1.442695
    %v2009 = vpow.pop %v2008
    %v2010 = vmul.f32 %v1929, 1.442695
    %v2011 = vpow.pop %v2010
    %v2012 = vmul.f32 %v1930, 1.442695
    %v2013 = vpow.pop %v2012
    %v2014 = vmul.f32 %v1931, 1.442695
    %v2015 = vpow.pop %v2014
    %v2016 = vmul.f32 %v1932, 1.442695
    %v2017 = vpow.pop %v2016
    %v2018 = vmul.f32 %v1933, 1.442695
    %v2019 = vpow.pop %v2018
    %v2020 = vmul.f32 %v1934, 1.442695
    %v2021 = vpow.pop %v2020
    %v2022 = vmul.f32 %v1935, 1.442695
    %v2023 = vpow.pop %v2022
    %v2024 = vmul.f32 %v1936, 1.442695
    %v2025 = vpow.pop %v2024
    %v2026 = vmul.f32 %v1937, 1.442695
    %v2027 = vpow.pop %v2026
    %v2028 = vmul.f32 %v1938, 1.442695
    %v2029 = vpow.pop %v2028
    %v2030 = vmul.f32 %v1939, 1.442695
    %v2031 = vpow.pop %v2030
    %v2032 = vmul.f32 %v1940, 1.442695
    %v2033 = vpow.pop %v2032
    %v2034 = vmul.f32 %v1941, 1.442695
    %v2035 = vpow.pop %v2034
    %v2036 = vmul.f32 %v1942, 1.442695
    %v2037 = vpow.pop %v2036
    %v2038 = vmul.f32 %v1943, 1.442695
    %v2039 = vpow.pop %v2038
    %v2040 = vmul.f32 %v1944, 1.442695
    %v2041 = vpow.pop %v2040
    %v2042 = vmul.f32 %v1945, 1.442695
    %v2043 = vpow.pop %v2042
    %v2044 = vmul.f32 %v1946, 1.442695
    %v2045 = vpow.pop %v2044
    %v2046 = vmul.f32 %v1947, 1.442695
    %v2047 = vpow.pop %v2046
    %v2048 = vmul.f32 %v1948, 1.442695
    %v2049 = vpow.pop %v2048
    %v2050 = vmul.f32 %v1949, 1.442695
    %v2051 = vpow.pop %v2050
    %v2052 = vmul.f32 %v1950, 1.442695
    %v2053 = vpow.pop %v2052
    %v2054 = vmul.f32 %v1951, 1.442695
    %v2055 = vpow.pop %v2054
    %v2056 = vmul.f32 %v1952, 1.442695
    %v2057 = vpow.pop %v2056
    %v2058 = vmul.f32 %v1953, 1.442695
    %v2059 = vpow.pop %v2058
    %v2060 = vmul.f32 %v1954, 1.442695
    %v2061 = vpow.pop %v2060
    %v2062 = vmul.f32 %v1955, 1.442695
    %v2063 = vpow.pop %v2062
    %v2064 = vmul.f32 %v1956, 1.442695
    %v2065 = vpow.pop %v2064
    %v2066 = vmul.f32 %v1957, 1.442695
    %v2067 = vpow.pop %v2066
    %v2068 = vmul.f32 %v1958, 1.442695
    %v2069 = vpow.pop %v2068
    %v2070 = vmul.f32 %v1959, 1.442695
    %v2071 = vpow.pop %v2070
    %v2072 = vmul.f32 %v1960, 1.442695
    %v2073 = vpow.pop %v2072
    %v2074 = vmul.f32 %v1961, 1.442695
    %v2075 = vpow.pop %v2074
    %v2076 = vmul.f32 %v1962, 1.442695
    %v2077 = vpow.pop %v2076
    %v2078 = vmul.f32 %v1963, 1.442695
    %v2079 = vpow.pop %v2078
    %v2080 = vmul.f32 %v1964, 1.442695
    %v2081 = vpow.pop %v2080
    %v2082 = vmul.f32 %v1965, 1.442695
    %v2083 = vpow.pop %v2082
    %v2084 = vmul.f32 %v1966, 1.442695
    %v2085 = vpow.pop %v2084
    %v2086 = vmul.f32 %v1967, 1.442695
    %v2087 = vpow.pop %v2086
    %v2088 = vmul.f32 %v1968, 1.442695
    %v2089 = vpow.pop %v2088
    %v2090 = vmul.f32 %v1969, 1.442695
    %v2091 = vpow.pop %v2090
    %v2092 = vmul.f32 %v1970, 1.442695
    %v2093 = vpow.pop %v2092
    %v2094 = vmul.f32 %v1971, 1.442695
    %v2095 = vpow.pop %v2094
    %v2096 = vmul.f32 %v1972, 1.442695
    %v2097 = vpow.pop %v2096
    %v2098 = vmul.f32 %v1973, 1.442695
    %v2099 = vpow.pop %v2098
    %v2100 = vmul.f32 %v1974, 1.442695
    %v2101 = vpow.pop %v2100
    %v2102 = vmul.f32 %v1975, 1.442695
    %v2103 = vpow.pop %v2102
    %v2104 = vadd.f32 %v1977, %v1979
    %2105 = vadd.xlane.f32.xlu0 %v2104
    %v2106 = vpop.xlane.xlu0 %2105
    %v2107 = vadd.f32 %v1981, %v1983
    %2108 = vadd.xlane.f32.xlu0 %v2107
    %v2109 = vpop.xlane.xlu0 %2108
    %v2110 = vadd.f32 %v1985, %v1987
    %2111 = vadd.xlane.f32.xlu0 %v2110
    %v2112 = vpop.xlane.xlu0 %2111
    %v2113 = vadd.f32 %v1989, %v1991
    %2114 = vadd.xlane.f32.xlu0 %v2113
    %v2115 = vpop.xlane.xlu0 %2114
    %v2116 = vadd.f32 %v1993, %v1995
    %2117 = vadd.xlane.f32.xlu0 %v2116
    %v2118 = vpop.xlane.xlu0 %2117
    %v2119 = vadd.f32 %v1997, %v1999
    %2120 = vadd.xlane.f32.xlu0 %v2119
    %v2121 = vpop.xlane.xlu0 %2120
    %v2122 = vadd.f32 %v2001, %v2003
    %2123 = vadd.xlane.f32.xlu0 %v2122
    %v2124 = vpop.xlane.xlu0 %2123
    %v2125 = vadd.f32 %v2005, %v2007
    %2126 = vadd.xlane.f32.xlu0 %v2125
    %v2127 = vpop.xlane.xlu0 %2126
    %v2128 = vadd.f32 %v2009, %v2011
    %2129 = vadd.xlane.f32.xlu0 %v2128
    %v2130 = vpop.xlane.xlu0 %2129
    %v2131 = vadd.f32 %v2013, %v2015
    %2132 = vadd.xlane.f32.xlu0 %v2131
    %v2133 = vpop.xlane.xlu0 %2132
    %v2134 = vadd.f32 %v2017, %v2019
    %2135 = vadd.xlane.f32.xlu0 %v2134
    %v2136 = vpop.xlane.xlu0 %2135
    %v2137 = vadd.f32 %v2021, %v2023
    %2138 = vadd.xlane.f32.xlu0 %v2137
    %v2139 = vpop.xlane.xlu0 %2138
    %v2140 = vadd.f32 %v2025, %v2027
    %2141 = vadd.xlane.f32.xlu0 %v2140
    %v2142 = vpop.xlane.xlu0 %2141
    %v2143 = vadd.f32 %v2029, %v2031
    %2144 = vadd.xlane.f32.xlu0 %v2143
    %v2145 = vpop.xlane.xlu0 %2144
    %v2146 = vadd.f32 %v2033, %v2035
    %2147 = vadd.xlane.f32.xlu0 %v2146
    %v2148 = vpop.xlane.xlu0 %2147
    %v2149 = vadd.f32 %v2037, %v2039
    %2150 = vadd.xlane.f32.xlu0 %v2149
    %v2151 = vpop.xlane.xlu0 %2150
    %v2152 = vadd.f32 %v2041, %v2043
    %2153 = vadd.xlane.f32.xlu0 %v2152
    %v2154 = vpop.xlane.xlu0 %2153
    %v2155 = vadd.f32 %v2045, %v2047
    %2156 = vadd.xlane.f32.xlu0 %v2155
    %v2157 = vpop.xlane.xlu0 %2156
    %v2158 = vadd.f32 %v2049, %v2051
    %2159 = vadd.xlane.f32.xlu0 %v2158
    %v2160 = vpop.xlane.xlu0 %2159
    %v2161 = vadd.f32 %v2053, %v2055
    %2162 = vadd.xlane.f32.xlu0 %v2161
    %v2163 = vpop.xlane.xlu0 %2162
    %v2164 = vadd.f32 %v2057, %v2059
    %2165 = vadd.xlane.f32.xlu0 %v2164
    %v2166 = vpop.xlane.xlu0 %2165
    %v2167 = vadd.f32 %v2061, %v2063
    %2168 = vadd.xlane.f32.xlu0 %v2167
    %v2169 = vpop.xlane.xlu0 %2168
    %v2170 = vadd.f32 %v2065, %v2067
    %2171 = vadd.xlane.f32.xlu0 %v2170
    %v2172 = vpop.xlane.xlu0 %2171
    %v2173 = vadd.f32 %v2069, %v2071
    %2174 = vadd.xlane.f32.xlu0 %v2173
    %v2175 = vpop.xlane.xlu0 %2174
    %v2176 = vadd.f32 %v2073, %v2075
    %2177 = vadd.xlane.f32.xlu0 %v2176
    %v2178 = vpop.xlane.xlu0 %2177
    %v2179 = vadd.f32 %v2077, %v2079
    %2180 = vadd.xlane.f32.xlu0 %v2179
    %v2181 = vpop.xlane.xlu0 %2180
    %v2182 = vadd.f32 %v2081, %v2083
    %2183 = vadd.xlane.f32.xlu0 %v2182
    %v2184 = vpop.xlane.xlu0 %2183
    %v2185 = vadd.f32 %v2085, %v2087
    %2186 = vadd.xlane.f32.xlu0 %v2185
    %v2187 = vpop.xlane.xlu0 %2186
    %v2188 = vadd.f32 %v2089, %v2091
    %2189 = vadd.xlane.f32.xlu0 %v2188
    %v2190 = vpop.xlane.xlu0 %2189
    %v2191 = vadd.f32 %v2093, %v2095
    %2192 = vadd.xlane.f32.xlu0 %v2191
    %v2193 = vpop.xlane.xlu0 %2192
    %v2194 = vadd.f32 %v2097, %v2099
    %2195 = vadd.xlane.f32.xlu0 %v2194
    %v2196 = vpop.xlane.xlu0 %2195
    %v2197 = vadd.f32 %v2101, %v2103
    %2198 = vadd.xlane.f32.xlu0 %v2197
    %v2199 = vpop.xlane.xlu0 %2198
    %v2200 = vunpack.c.l.bf16 %v1703
    %v2201 = vunpack.c.h.bf16 %v1703
    %v2202 = vunpack.c.l.bf16 %v1704
    %v2203 = vunpack.c.h.bf16 %v1704
    %v2204 = vunpack.c.l.bf16 %v1705
    %v2205 = vunpack.c.h.bf16 %v1705
    %v2206 = vunpack.c.l.bf16 %v1706
    %v2207 = vunpack.c.h.bf16 %v1706
    %v2208 = vunpack.c.l.bf16 %v1707
    %v2209 = vunpack.c.h.bf16 %v1707
    %v2210 = vunpack.c.l.bf16 %v1708
    %v2211 = vunpack.c.h.bf16 %v1708
    %v2212 = vunpack.c.l.bf16 %v1709
    %v2213 = vunpack.c.h.bf16 %v1709
    %v2214 = vunpack.c.l.bf16 %v1710
    %v2215 = vunpack.c.h.bf16 %v1710
    %v2216 = vunpack.c.l.bf16 %v1711
    %v2217 = vunpack.c.h.bf16 %v1711
    %v2218 = vunpack.c.l.bf16 %v1712
    %v2219 = vunpack.c.h.bf16 %v1712
    %v2220 = vunpack.c.l.bf16 %v1713
    %v2221 = vunpack.c.h.bf16 %v1713
    %v2222 = vunpack.c.l.bf16 %v1714
    %v2223 = vunpack.c.h.bf16 %v1714
    %v2224 = vunpack.c.l.bf16 %v1715
    %v2225 = vunpack.c.h.bf16 %v1715
    %v2226 = vunpack.c.l.bf16 %v1716
    %v2227 = vunpack.c.h.bf16 %v1716
    %v2228 = vunpack.c.l.bf16 %v1717
    %v2229 = vunpack.c.h.bf16 %v1717
    %v2230 = vunpack.c.l.bf16 %v1718
    %v2231 = vunpack.c.h.bf16 %v1718
    %v2232 = vmul.f32 %v2200, %v2200
    %v2233 = vmul.f32 %v2201, %v2201
    %v2234 = vmul.f32 %v2202, %v2202
    %v2235 = vmul.f32 %v2203, %v2203
    %v2236 = vmul.f32 %v2204, %v2204
    %v2237 = vmul.f32 %v2205, %v2205
    %v2238 = vmul.f32 %v2206, %v2206
    %v2239 = vmul.f32 %v2207, %v2207
    %v2240 = vmul.f32 %v2208, %v2208
    %v2241 = vmul.f32 %v2209, %v2209
    %v2242 = vmul.f32 %v2210, %v2210
    %v2243 = vmul.f32 %v2211, %v2211
    %v2244 = vmul.f32 %v2212, %v2212
    %v2245 = vmul.f32 %v2213, %v2213
    %v2246 = vmul.f32 %v2214, %v2214
    %v2247 = vmul.f32 %v2215, %v2215
    %v2248 = vmul.f32 %v2216, %v2216
    %v2249 = vmul.f32 %v2217, %v2217
    %v2250 = vmul.f32 %v2218, %v2218
    %v2251 = vmul.f32 %v2219, %v2219
    %v2252 = vmul.f32 %v2220, %v2220
    %v2253 = vmul.f32 %v2221, %v2221
    %v2254 = vmul.f32 %v2222, %v2222
    %v2255 = vmul.f32 %v2223, %v2223
    %v2256 = vmul.f32 %v2224, %v2224
    %v2257 = vmul.f32 %v2225, %v2225
    %v2258 = vmul.f32 %v2226, %v2226
    %v2259 = vmul.f32 %v2227, %v2227
    %v2260 = vmul.f32 %v2228, %v2228
    %v2261 = vmul.f32 %v2229, %v2229
    %v2262 = vmul.f32 %v2230, %v2230
    %v2263 = vmul.f32 %v2231, %v2231
    %2264 = vadd.xlane.f32.xlu0 %v2232
    %v2265 = vpop.xlane.xlu0 %2264
    %2266 = vadd.xlane.f32.xlu0 %v2233
    %v2267 = vpop.xlane.xlu0 %2266
    %2268 = vadd.xlane.f32.xlu0 %v2234
    %v2269 = vpop.xlane.xlu0 %2268
    %2270 = vadd.xlane.f32.xlu0 %v2235
    %v2271 = vpop.xlane.xlu0 %2270
    %2272 = vadd.xlane.f32.xlu0 %v2236
    %v2273 = vpop.xlane.xlu0 %2272
    %2274 = vadd.xlane.f32.xlu0 %v2237
    %v2275 = vpop.xlane.xlu0 %2274
    %2276 = vadd.xlane.f32.xlu0 %v2238
    %v2277 = vpop.xlane.xlu0 %2276
    %2278 = vadd.xlane.f32.xlu0 %v2239
    %v2279 = vpop.xlane.xlu0 %2278
    %2280 = vadd.xlane.f32.xlu0 %v2240
    %v2281 = vpop.xlane.xlu0 %2280
    %2282 = vadd.xlane.f32.xlu0 %v2241
    %v2283 = vpop.xlane.xlu0 %2282
    %2284 = vadd.xlane.f32.xlu0 %v2242
    %v2285 = vpop.xlane.xlu0 %2284
    %2286 = vadd.xlane.f32.xlu0 %v2243
    %v2287 = vpop.xlane.xlu0 %2286
    %2288 = vadd.xlane.f32.xlu0 %v2244
    %v2289 = vpop.xlane.xlu0 %2288
    %2290 = vadd.xlane.f32.xlu0 %v2245
    %v2291 = vpop.xlane.xlu0 %2290
    %2292 = vadd.xlane.f32.xlu0 %v2246
    %v2293 = vpop.xlane.xlu0 %2292
    %2294 = vadd.xlane.f32.xlu0 %v2247
    %v2295 = vpop.xlane.xlu0 %2294
    %2296 = vadd.xlane.f32.xlu0 %v2248
    %v2297 = vpop.xlane.xlu0 %2296
    %2298 = vadd.xlane.f32.xlu0 %v2249
    %v2299 = vpop.xlane.xlu0 %2298
    %2300 = vadd.xlane.f32.xlu0 %v2250
    %v2301 = vpop.xlane.xlu0 %2300
    %2302 = vadd.xlane.f32.xlu0 %v2251
    %v2303 = vpop.xlane.xlu0 %2302
    %2304 = vadd.xlane.f32.xlu0 %v2252
    %v2305 = vpop.xlane.xlu0 %2304
    %2306 = vadd.xlane.f32.xlu0 %v2253
    %v2307 = vpop.xlane.xlu0 %2306
    %2308 = vadd.xlane.f32.xlu0 %v2254
    %v2309 = vpop.xlane.xlu0 %2308
    %2310 = vadd.xlane.f32.xlu0 %v2255
    %v2311 = vpop.xlane.xlu0 %2310
    %2312 = vadd.xlane.f32.xlu0 %v2256
    %v2313 = vpop.xlane.xlu0 %2312
    %2314 = vadd.xlane.f32.xlu0 %v2257
    %v2315 = vpop.xlane.xlu0 %2314
    %2316 = vadd.xlane.f32.xlu0 %v2258
    %v2317 = vpop.xlane.xlu0 %2316
    %2318 = vadd.xlane.f32.xlu0 %v2259
    %v2319 = vpop.xlane.xlu0 %2318
    %2320 = vadd.xlane.f32.xlu0 %v2260
    %v2321 = vpop.xlane.xlu0 %2320
    %2322 = vadd.xlane.f32.xlu0 %v2261
    %v2323 = vpop.xlane.xlu0 %2322
    %2324 = vadd.xlane.f32.xlu0 %v2262
    %v2325 = vpop.xlane.xlu0 %2324
    %2326 = vadd.xlane.f32.xlu0 %v2263
    %v2327 = vpop.xlane.xlu0 %2326
    %v2328 = vmul.f32 %v2265, 2.0
    %v2329 = vmul.f32 %v2267, 2.0
    %v2330 = vmul.f32 %v2269, 2.0
    %v2331 = vmul.f32 %v2271, 2.0
    %v2332 = vmul.f32 %v2273, 2.0
    %v2333 = vmul.f32 %v2275, 2.0
    %v2334 = vmul.f32 %v2277, 2.0
    %v2335 = vmul.f32 %v2279, 2.0
    %v2336 = vmul.f32 %v2281, 2.0
    %v2337 = vmul.f32 %v2283, 2.0
    %v2338 = vmul.f32 %v2285, 2.0
    %v2339 = vmul.f32 %v2287, 2.0
    %v2340 = vmul.f32 %v2289, 2.0
    %v2341 = vmul.f32 %v2291, 2.0
    %v2342 = vmul.f32 %v2293, 2.0
    %v2343 = vmul.f32 %v2295, 2.0
    %v2344 = vmul.f32 %v2297, 2.0
    %v2345 = vmul.f32 %v2299, 2.0
    %v2346 = vmul.f32 %v2301, 2.0
    %v2347 = vmul.f32 %v2303, 2.0
    %v2348 = vmul.f32 %v2305, 2.0
    %v2349 = vmul.f32 %v2307, 2.0
    %v2350 = vmul.f32 %v2309, 2.0
    %v2351 = vmul.f32 %v2311, 2.0
    %v2352 = vmul.f32 %v2313, 2.0
    %v2353 = vmul.f32 %v2315, 2.0
    %v2354 = vmul.f32 %v2317, 2.0
    %v2355 = vmul.f32 %v2319, 2.0
    %v2356 = vmul.f32 %v2321, 2.0
    %v2357 = vmul.f32 %v2323, 2.0
    %v2358 = vmul.f32 %v2325, 2.0
    %v2359 = vmul.f32 %v2327, 2.0
    %v2360 = vmul.f32 %v2328, 1.442695
    %v2361 = vpow.pop %v2360
    %v2362 = vmul.f32 %v2329, 1.442695
    %v2363 = vpow.pop %v2362
    %v2364 = vmul.f32 %v2330, 1.442695
    %v2365 = vpow.pop %v2364
    %v2366 = vmul.f32 %v2331, 1.442695
    %v2367 = vpow.pop %v2366
    %v2368 = vmul.f32 %v2332, 1.442695
    %v2369 = vpow.pop %v2368
    %v2370 = vmul.f32 %v2333, 1.442695
    %v2371 = vpow.pop %v2370
    %v2372 = vmul.f32 %v2334, 1.442695
    %v2373 = vpow.pop %v2372
    %v2374 = vmul.f32 %v2335, 1.442695
    %v2375 = vpow.pop %v2374
    %v2376 = vmul.f32 %v2336, 1.442695
    %v2377 = vpow.pop %v2376
    %v2378 = vmul.f32 %v2337, 1.442695
    %v2379 = vpow.pop %v2378
    %v2380 = vmul.f32 %v2338, 1.442695
    %v2381 = vpow.pop %v2380
    %v2382 = vmul.f32 %v2339, 1.442695
    %v2383 = vpow.pop %v2382
    %v2384 = vmul.f32 %v2340, 1.442695
    %v2385 = vpow.pop %v2384
    %v2386 = vmul.f32 %v2341, 1.442695
    %v2387 = vpow.pop %v2386
    %v2388 = vmul.f32 %v2342, 1.442695
    %v2389 = vpow.pop %v2388
    %v2390 = vmul.f32 %v2343, 1.442695
    %v2391 = vpow.pop %v2390
    %v2392 = vmul.f32 %v2344, 1.442695
    %v2393 = vpow.pop %v2392
    %v2394 = vmul.f32 %v2345, 1.442695
    %v2395 = vpow.pop %v2394
    %v2396 = vmul.f32 %v2346, 1.442695
    %v2397 = vpow.pop %v2396
    %v2398 = vmul.f32 %v2347, 1.442695
    %v2399 = vpow.pop %v2398
    %v2400 = vmul.f32 %v2348, 1.442695
    %v2401 = vpow.pop %v2400
    %v2402 = vmul.f32 %v2349, 1.442695
    %v2403 = vpow.pop %v2402
    %v2404 = vmul.f32 %v2350, 1.442695
    %v2405 = vpow.pop %v2404
    %v2406 = vmul.f32 %v2351, 1.442695
    %v2407 = vpow.pop %v2406
    %v2408 = vmul.f32 %v2352, 1.442695
    %v2409 = vpow.pop %v2408
    %v2410 = vmul.f32 %v2353, 1.442695
    %v2411 = vpow.pop %v2410
    %v2412 = vmul.f32 %v2354, 1.442695
    %v2413 = vpow.pop %v2412
    %v2414 = vmul.f32 %v2355, 1.442695
    %v2415 = vpow.pop %v2414
    %v2416 = vmul.f32 %v2356, 1.442695
    %v2417 = vpow.pop %v2416
    %v2418 = vmul.f32 %v2357, 1.442695
    %v2419 = vpow.pop %v2418
    %v2420 = vmul.f32 %v2358, 1.442695
    %v2421 = vpow.pop %v2420
    %v2422 = vmul.f32 %v2359, 1.442695
    %v2423 = vpow.pop %v2422
    %v2424 = vmul.f32 %v2200, %v2216
    %v2425 = vmul.f32 %v2201, %v2217
    %v2426 = vmul.f32 %v2202, %v2218
    %v2427 = vmul.f32 %v2203, %v2219
    %v2428 = vmul.f32 %v2204, %v2220
    %v2429 = vmul.f32 %v2205, %v2221
    %v2430 = vmul.f32 %v2206, %v2222
    %v2431 = vmul.f32 %v2207, %v2223
    %v2432 = vmul.f32 %v2208, %v2224
    %v2433 = vmul.f32 %v2209, %v2225
    %v2434 = vmul.f32 %v2210, %v2226
    %v2435 = vmul.f32 %v2211, %v2227
    %v2436 = vmul.f32 %v2212, %v2228
    %v2437 = vmul.f32 %v2213, %v2229
    %v2438 = vmul.f32 %v2214, %v2230
    %v2439 = vmul.f32 %v2215, %v2231
    %2440 = vadd.xlane.f32.xlu0 %v2424
    %v2441 = vpop.xlane.xlu0 %2440
    %2442 = vadd.xlane.f32.xlu0 %v2425
    %v2443 = vpop.xlane.xlu0 %2442
    %2444 = vadd.xlane.f32.xlu0 %v2426
    %v2445 = vpop.xlane.xlu0 %2444
    %2446 = vadd.xlane.f32.xlu0 %v2427
    %v2447 = vpop.xlane.xlu0 %2446
    %2448 = vadd.xlane.f32.xlu0 %v2428
    %v2449 = vpop.xlane.xlu0 %2448
    %2450 = vadd.xlane.f32.xlu0 %v2429
    %v2451 = vpop.xlane.xlu0 %2450
    %2452 = vadd.xlane.f32.xlu0 %v2430
    %v2453 = vpop.xlane.xlu0 %2452
    %2454 = vadd.xlane.f32.xlu0 %v2431
    %v2455 = vpop.xlane.xlu0 %2454
    %2456 = vadd.xlane.f32.xlu0 %v2432
    %v2457 = vpop.xlane.xlu0 %2456
    %2458 = vadd.xlane.f32.xlu0 %v2433
    %v2459 = vpop.xlane.xlu0 %2458
    %2460 = vadd.xlane.f32.xlu0 %v2434
    %v2461 = vpop.xlane.xlu0 %2460
    %2462 = vadd.xlane.f32.xlu0 %v2435
    %v2463 = vpop.xlane.xlu0 %2462
    %2464 = vadd.xlane.f32.xlu0 %v2436
    %v2465 = vpop.xlane.xlu0 %2464
    %2466 = vadd.xlane.f32.xlu0 %v2437
    %v2467 = vpop.xlane.xlu0 %2466
    %2468 = vadd.xlane.f32.xlu0 %v2438
    %v2469 = vpop.xlane.xlu0 %2468
    %2470 = vadd.xlane.f32.xlu0 %v2439
    %v2471 = vpop.xlane.xlu0 %2470
    %v2472 = vmul.f32 %v2441, 2.0
    %v2473 = vmul.f32 %v2443, 2.0
    %v2474 = vmul.f32 %v2445, 2.0
    %v2475 = vmul.f32 %v2447, 2.0
    %v2476 = vmul.f32 %v2449, 2.0
    %v2477 = vmul.f32 %v2451, 2.0
    %v2478 = vmul.f32 %v2453, 2.0
    %v2479 = vmul.f32 %v2455, 2.0
    %v2480 = vmul.f32 %v2457, 2.0
    %v2481 = vmul.f32 %v2459, 2.0
    %v2482 = vmul.f32 %v2461, 2.0
    %v2483 = vmul.f32 %v2463, 2.0
    %v2484 = vmul.f32 %v2465, 2.0
    %v2485 = vmul.f32 %v2467, 2.0
    %v2486 = vmul.f32 %v2469, 2.0
    %v2487 = vmul.f32 %v2471, 2.0
    %v2488 = vsub.f32 %v2106, %v2361
    %v2489 = vsub.f32 %v2109, %v2363
    %v2490 = vsub.f32 %v2112, %v2365
    %v2491 = vsub.f32 %v2115, %v2367
    %v2492 = vsub.f32 %v2118, %v2369
    %v2493 = vsub.f32 %v2121, %v2371
    %v2494 = vsub.f32 %v2124, %v2373
    %v2495 = vsub.f32 %v2127, %v2375
    %v2496 = vsub.f32 %v2130, %v2377
    %v2497 = vsub.f32 %v2133, %v2379
    %v2498 = vsub.f32 %v2136, %v2381
    %v2499 = vsub.f32 %v2139, %v2383
    %v2500 = vsub.f32 %v2142, %v2385
    %v2501 = vsub.f32 %v2145, %v2387
    %v2502 = vsub.f32 %v2148, %v2389
    %v2503 = vsub.f32 %v2151, %v2391
    %v2504 = vsub.f32 %v2154, %v2393
    %v2505 = vsub.f32 %v2157, %v2395
    %v2506 = vsub.f32 %v2160, %v2397
    %v2507 = vsub.f32 %v2163, %v2399
    %v2508 = vsub.f32 %v2166, %v2401
    %v2509 = vsub.f32 %v2169, %v2403
    %v2510 = vsub.f32 %v2172, %v2405
    %v2511 = vsub.f32 %v2175, %v2407
    %v2512 = vsub.f32 %v2178, %v2409
    %v2513 = vsub.f32 %v2181, %v2411
    %v2514 = vsub.f32 %v2184, %v2413
    %v2515 = vsub.f32 %v2187, %v2415
    %v2516 = vsub.f32 %v2190, %v2417
    %v2517 = vsub.f32 %v2193, %v2419
    %v2518 = vsub.f32 %v2196, %v2421
    %v2519 = vsub.f32 %v2199, %v2423
    %v2520 = vlog2.pop %v2488
    %v2521 = vmul.f32 %v2520, 0.6931472
    %v2522 = vlog2.pop %v2489
    %v2523 = vmul.f32 %v2522, 0.6931472
    %v2524 = vlog2.pop %v2490
    %v2525 = vmul.f32 %v2524, 0.6931472
    %v2526 = vlog2.pop %v2491
    %v2527 = vmul.f32 %v2526, 0.6931472
    %v2528 = vlog2.pop %v2492
    %v2529 = vmul.f32 %v2528, 0.6931472
    %v2530 = vlog2.pop %v2493
    %v2531 = vmul.f32 %v2530, 0.6931472
    %v2532 = vlog2.pop %v2494
    %v2533 = vmul.f32 %v2532, 0.6931472
    %v2534 = vlog2.pop %v2495
    %v2535 = vmul.f32 %v2534, 0.6931472
    %v2536 = vlog2.pop %v2496
    %v2537 = vmul.f32 %v2536, 0.6931472
    %v2538 = vlog2.pop %v2497
    %v2539 = vmul.f32 %v2538, 0.6931472
    %v2540 = vlog2.pop %v2498
    %v2541 = vmul.f32 %v2540, 0.6931472
    %v2542 = vlog2.pop %v2499
    %v2543 = vmul.f32 %v2542, 0.6931472
    %v2544 = vlog2.pop %v2500
    %v2545 = vmul.f32 %v2544, 0.6931472
    %v2546 = vlog2.pop %v2501
    %v2547 = vmul.f32 %v2546, 0.6931472
    %v2548 = vlog2.pop %v2502
    %v2549 = vmul.f32 %v2548, 0.6931472
    %v2550 = vlog2.pop %v2503
    %v2551 = vmul.f32 %v2550, 0.6931472
    %v2552 = vlog2.pop %v2504
    %v2553 = vmul.f32 %v2552, 0.6931472
    %v2554 = vlog2.pop %v2505
    %v2555 = vmul.f32 %v2554, 0.6931472
    %v2556 = vlog2.pop %v2506
    %v2557 = vmul.f32 %v2556, 0.6931472
    %v2558 = vlog2.pop %v2507
    %v2559 = vmul.f32 %v2558, 0.6931472
    %v2560 = vlog2.pop %v2508
    %v2561 = vmul.f32 %v2560, 0.6931472
    %v2562 = vlog2.pop %v2509
    %v2563 = vmul.f32 %v2562, 0.6931472
    %v2564 = vlog2.pop %v2510
    %v2565 = vmul.f32 %v2564, 0.6931472
    %v2566 = vlog2.pop %v2511
    %v2567 = vmul.f32 %v2566, 0.6931472
    %v2568 = vlog2.pop %v2512
    %v2569 = vmul.f32 %v2568, 0.6931472
    %v2570 = vlog2.pop %v2513
    %v2571 = vmul.f32 %v2570, 0.6931472
    %v2572 = vlog2.pop %v2514
    %v2573 = vmul.f32 %v2572, 0.6931472
    %v2574 = vlog2.pop %v2515
    %v2575 = vmul.f32 %v2574, 0.6931472
    %v2576 = vlog2.pop %v2516
    %v2577 = vmul.f32 %v2576, 0.6931472
    %v2578 = vlog2.pop %v2517
    %v2579 = vmul.f32 %v2578, 0.6931472
    %v2580 = vlog2.pop %v2518
    %v2581 = vmul.f32 %v2580, 0.6931472
    %v2582 = vlog2.pop %v2519
    %v2583 = vmul.f32 %v2582, 0.6931472
    %v2584 = vadd.f32 %v2521, %v2523
    %v2585 = vadd.f32 %v2584, %v2525
    %v2586 = vadd.f32 %v2585, %v2527
    %v2587 = vadd.f32 %v2586, %v2529
    %v2588 = vadd.f32 %v2587, %v2531
    %v2589 = vadd.f32 %v2588, %v2533
    %v2590 = vadd.f32 %v2589, %v2535
    %v2591 = vadd.f32 %v2590, %v2537
    %v2592 = vadd.f32 %v2591, %v2539
    %v2593 = vadd.f32 %v2592, %v2541
    %v2594 = vadd.f32 %v2593, %v2543
    %v2595 = vadd.f32 %v2594, %v2545
    %v2596 = vadd.f32 %v2595, %v2547
    %v2597 = vadd.f32 %v2596, %v2549
    %v2598 = vadd.f32 %v2597, %v2551
    %v2599 = vadd.f32 %v2598, %v2553
    %v2600 = vadd.f32 %v2599, %v2555
    %v2601 = vadd.f32 %v2600, %v2557
    %v2602 = vadd.f32 %v2601, %v2559
    %v2603 = vadd.f32 %v2602, %v2561
    %v2604 = vadd.f32 %v2603, %v2563
    %v2605 = vadd.f32 %v2604, %v2565
    %v2606 = vadd.f32 %v2605, %v2567
    %v2607 = vadd.f32 %v2606, %v2569
    %v2608 = vadd.f32 %v2607, %v2571
    %v2609 = vadd.f32 %v2608, %v2573
    %v2610 = vadd.f32 %v2609, %v2575
    %v2611 = vadd.f32 %v2610, %v2577
    %v2612 = vadd.f32 %v2611, %v2579
    %v2613 = vadd.f32 %v2612, %v2581
    %v2614 = vadd.f32 %v2613, %v2583
    %v2615 = vrot.slane %v2614, 4
    %v2616 = vadd.f32 %v2614, %v2615
    %v2617 = vrot.slane %v2616, 2
    %v2618 = vadd.f32 %v2616, %v2617
    %v2619 = vrot.slane %v2618, 1
    %v2620 = vadd.f32 %v2618, %v2619
    %v2621 = vadd.f32 %v2472, %v2473
    %v2622 = vadd.f32 %v2621, %v2474
    %v2623 = vadd.f32 %v2622, %v2475
    %v2624 = vadd.f32 %v2623, %v2476
    %v2625 = vadd.f32 %v2624, %v2477
    %v2626 = vadd.f32 %v2625, %v2478
    %v2627 = vadd.f32 %v2626, %v2479
    %v2628 = vadd.f32 %v2627, %v2480
    %v2629 = vadd.f32 %v2628, %v2481
    %v2630 = vadd.f32 %v2629, %v2482
    %v2631 = vadd.f32 %v2630, %v2483
    %v2632 = vadd.f32 %v2631, %v2484
    %v2633 = vadd.f32 %v2632, %v2485
    %v2634 = vadd.f32 %v2633, %v2486
    %v2635 = vadd.f32 %v2634, %v2487
    %v2636 = vrot.slane %v2635, 4
    %v2637 = vadd.f32 %v2635, %v2636
    %v2638 = vrot.slane %v2637, 2
    %v2639 = vadd.f32 %v2637, %v2638
    %v2640 = vrot.slane %v2639, 1
    %v2641 = vadd.f32 %v2639, %v2640
    %v2642 = vmul.f32 %v2641, 2.0
    %v2643 = vsub.f32 %v2620, %v2642
    %v2644 = vmul.f32 %v2643, 0.00390625
    %vm2645 = vcmask 0
    %2646 = vst.msk [vmem:[#allocation2] sm:$0x1] %vm2645, %v2644
    // Predicated region
    $region50: #{model_forward.3} parent=1 // pred_check
      _
    $region51: #{model_forward.3} parent=1 // pred_check_branch
      %2648 = sbr.rel (0) target = $region53
    $region52: #{model_forward.3} parent=1 // pred_region
      %s2650 = ssub.s32 16, 16
      %2651 = vsyncadd [#allocation3], %s2650
      %s2653 = sshll.u32 [#allocation2], 4
      %s2654 = int_to_ptr.vmem [resolvable:$true] %s2653
      %2656 = dma.vmem_to_hbm [thread:$0]  %s2654, 16, %s12, [#allocation3]
    $region53: #{model_forward.3} parent=1 // pred_fallthru
      _
    // Predicated region
    $region54: #{model_forward.3} parent=1 // pred_check
      _
    $region55: #{model_forward.3} parent=1 // pred_check_branch
      %2658 = sbr.rel (0) target = $region57
    $region56: #{model_forward.3} parent=1 // pred_region
      %2659 = dma.done [#allocation3], 16
    $region57: #{model_forward.3} parent=1 // pred_fallthru
      _
    %2660 = vsyncpa [#allocation3], 1

</llo_original>
